<compile_context>
chip_gen: v7x
topology: tpu7x:2x2x1
jax: 0.10.0
libtpu: 0.0.40
codegen_flags: <defaults>
</compile_context>

<pallas_src>
import jax
import jax.numpy as jnp
from jax import lax
from jax.experimental import pallas as pl
from jax.experimental.pallas import tpu as pltpu


def _prefix_mlp_kernel(layer_ref, x_ref, w1_ref, b1_ref, w2_ref, b2_ref,
                       o_ref, acc_ref):
    # grid = (H // tk,) over chunks of the MLP's intermediate dimension:
    #   h_k  = relu(x @ W1[:, chunk] + b1[chunk])     (P, tk)
    #   acc += h_k @ W2[chunk, :]                     (P, H)  f32 scratch
    #   last step: out = acc + b2
    del layer_ref                       # only consumed by the index_maps
    k = pl.program_id(0)

    @pl.when(k == 0)
    def _():
        acc_ref[...] = jnp.zeros_like(acc_ref)

    x = x_ref[...].astype(w1_ref.dtype)               # in-kernel dtype cast
    h = jnp.dot(x, w1_ref[...],
                preferred_element_type=jnp.float32) + b1_ref[...]
    # NOTE: h is cast to the compute dtype before the second matmul (extra
    # rounding vs a pure-f32 reference); use compute_dtype=jnp.float32 for
    # accuracy-sensitive callers.
    h = jnp.maximum(h, 0.0).astype(w2_ref.dtype)
    acc_ref[...] += jnp.dot(h, w2_ref[...],
                            preferred_element_type=jnp.float32)

    @pl.when(k == pl.num_programs(0) - 1)
    def _():
        o_ref[...] = (acc_ref[...] + b2_ref[...]).astype(o_ref.dtype)


def _as_dtype(a, dt):
    # No-op when already in the requested dtype (store weights in
    # compute_dtype up front to make this always a no-op).
    return a if a.dtype == jnp.dtype(dt) else a.astype(dt)


def _pick_k_tile(H, cdt_itemsize):
    # Largest {512,256,128} tile dividing H such that the two double-buffered
    # weight chunks ((H,tk) + (tk,H)) stay within ~24 MiB of VMEM.
    if H <= 512:
        return H
    for tk in (512, 256, 128):
        if H % tk:
            continue
        if 4 * H * tk * cdt_itemsize <= 24 * 1024 * 1024:
            return tk
    return 128 if H % 128 == 0 else H


def prefix_encoder_forward(params, batch_size, layer_id, *, prefix_length,
                           num_layers, hidden_size, prompt_func="none",
                           compute_dtype=jnp.bfloat16, use_kernel=None,
                           k_tile=None):
    P, L, H = prefix_length, num_layers, hidden_size
    emb = params["embedding"]                 # (P, L*H), untouched in HBM
    out_dtype = emb.dtype

    if prompt_func == "none":
        # Pure slice + lazy batch broadcast: a kernel only adds overhead.
        start = jnp.asarray(layer_id, jnp.int32) * H
        x = lax.dynamic_slice_in_dim(emb, start, H, axis=1)        # (P, H)
        return jnp.broadcast_to(x[None], (batch_size, P, H))

    if prompt_func != "mlp":
        raise NotImplementedError(prompt_func)   # TODO(synk): 'lstm' head

    cdt = compute_dtype if compute_dtype is not None else out_dtype
    cdt_sz = jnp.dtype(cdt).itemsize
    w1 = _as_dtype(params["w1"], cdt)                              # (H, H)
    w2 = _as_dtype(params["w2"], cdt)                              # (H, H)
    b1 = _as_dtype(params["b1"], jnp.float32).reshape(1, H)
    b2 = _as_dtype(params["b2"], jnp.float32).reshape(1, H)

    can_kernel = (H % 128 == 0)
    if use_kernel is None:
        # Tiny shapes are dominated by dispatch + DMA setup; XLA fusion wins.
        use_kernel = can_kernel and H >= 512
    if use_kernel and not can_kernel:
        raise ValueError("Pallas path requires hidden_size % 128 == 0; "
                         "use use_kernel=False for other sizes.")

    if not use_kernel:
        # Plain fused jnp expression (small / odd H).
        start = jnp.asarray(layer_id, jnp.int32) * H
        x = lax.dynamic_slice_in_dim(emb, start, H, axis=1).astype(cdt)
        h = jnp.maximum(
            jnp.dot(x, w1, preferred_element_type=jnp.float32) + b1, 0.0)
        y = jnp.dot(h.astype(cdt), w2,
                    preferred_element_type=jnp.float32) + b2
        y = y.astype(out_dtype)
        return jnp.broadcast_to(y[None], (batch_size, P, H))

    # ---------------- Pallas kernel path ----------------
    tk = k_tile if k_tile is not None else _pick_k_tile(H, cdt_sz)
    if H % tk or (tk % 128 and tk != H):
        raise ValueError(f"invalid k_tile={tk} for hidden_size={H}")
    nk = H // tk

    layer_arr = jnp.asarray([layer_id], jnp.int32)   # scalar-prefetch arg

    grid_spec = pltpu.PrefetchScalarGridSpec(
        num_scalar_prefetch=1,
        grid=(nk,),
        in_specs=[
            # Layer slice of the raw table, selected by the prefetched id.
            pl.BlockSpec((P, H), lambda k, lyr: (0, lyr[0])),
            pl.BlockSpec((H, tk), lambda k, lyr: (0, k)),   # W1 column chunk
            pl.BlockSpec((1, tk), lambda k, lyr: (0, k)),   # b1 chunk
            pl.BlockSpec((tk, H), lambda k, lyr: (k, 0)),   # W2 row chunk
            pl.BlockSpec((1, H), lambda k, lyr: (0, 0)),    # b2 (full)
        ],
        out_specs=pl.BlockSpec((P, H), lambda k, lyr: (0, 0)),
        scratch_shapes=[pltpu.VMEM((P, H), jnp.float32)],   # f32 accumulator
    )

    # VMEM budget: 2-deep pipeline buffers for every block + f32 accumulator.
    emb_sz = jnp.dtype(emb.dtype).itemsize
    out_sz = jnp.dtype(out_dtype).itemsize
    blk_bytes = (P * H * emb_sz            # layer slice block
                 + H * tk * cdt_sz         # W1 chunk
                 + tk * 4                  # b1 chunk (f32)
                 + tk * H * cdt_sz         # W2 chunk
                 + H * 4                   # b2 (f32)
                 + P * H * out_sz)         # output block
    vmem_need = 2 * blk_bytes + P * H * 4

    cparams = dict(dimension_semantics=("arbitrary",))      # reduction axis
    DEFAULT_SCOPED = 16 * 1024 * 1024    # v5e default scoped limit (floor)
    if vmem_need > DEFAULT_SCOPED:
        try:
            phys_vmem = int(pltpu.get_tpu_info().vmem_capacity_bytes)
        except Exception:
            phys_vmem = 64 * 1024 * 1024            # v7x per-TC (smallest)
        cparams["vmem_limit_bytes"] = int(
            min(vmem_need * 5 // 4, phys_vmem - (4 << 20)))

    y = pl.pallas_call(
        _prefix_mlp_kernel,
        out_shape=jax.ShapeDtypeStruct((P, H), out_dtype),
        grid_spec=grid_spec,
        compiler_params=pltpu.CompilerParams(**cparams),
    )(layer_arr, emb, w1, b1, w2, b2)

    # Batch "expand" as a lazy broadcast: MLP computed exactly once.
    return jnp.broadcast_to(y[None], (batch_size, P, H))


def _reference(params, batch_size, layer_id, *, prefix_length, num_layers,
               hidden_size, prompt_func):
    P, L, H = prefix_length, num_layers, hidden_size
    x = params["embedding"].reshape(P, L, H)[:, layer_id, :]       # (P, H)
    if prompt_func == "mlp":
        h = jnp.maximum(x @ params["w1"] + params["b1"], 0.0)
        x = (h @ params["w2"] + params["b2"]).astype(params["embedding"].dtype)
    return jnp.broadcast_to(x[None], (batch_size, P, H))


if __name__ == "__main__":
    # Keep all f32 matmuls (reference, jnp fallback, in-kernel f32 path) at
    # full precision so the semantic checks are apples-to-apples.
    jax.config.update("jax_default_matmul_precision", "highest")

    prefix_length = 16
    num_layers = 2
    hidden_size = 256           # multiple of 128 -> in-kernel layer slice OK
    batch_size = 2
    layer_id = 1

    key = jax.random.PRNGKey(0)
    k_emb, k_w1, k_b1, k_w2, k_b2 = jax.random.split(key, 5)
    params = {
        "embedding": jax.random.normal(
            k_emb, (prefix_length, num_layers * hidden_size), jnp.float32),
        "w1": jax.random.normal(k_w1, (hidden_size, hidden_size), jnp.float32) * 0.1,
        "b1": jax.random.normal(k_b1, (hidden_size,), jnp.float32) * 0.1,
        "w2": jax.random.normal(k_w2, (hidden_size, hidden_size), jnp.float32) * 0.1,
        "b2": jax.random.normal(k_b2, (hidden_size,), jnp.float32) * 0.1,
    }
    common = dict(prefix_length=prefix_length, num_layers=num_layers,
                  hidden_size=hidden_size)

    ok = True

    # 1) 'none' path: pure slice + broadcast (exact).
    out = jax.block_until_ready(prefix_encoder_forward(
        params, batch_size, layer_id, prompt_func="none", **common))
    ref = _reference(params, batch_size, layer_id, prompt_func="none", **common)
    ok &= out.shape == (batch_size, prefix_length, hidden_size)
    ok &= bool(jnp.allclose(out, ref, atol=1e-6, rtol=1e-6))

    # 2) 'mlp', Pallas kernel, f32 compute, k_tile=128 -> 2 grid steps
    #    (exercises the streamed-weight accumulation path): tight check.
    out = jax.block_until_ready(prefix_encoder_forward(
        params, batch_size, layer_id, prompt_func="mlp",
        compute_dtype=jnp.float32, use_kernel=True, k_tile=128, **common))
    ref = _reference(params, batch_size, layer_id, prompt_func="mlp", **common)
    ok &= out.shape == (batch_size, prefix_length, hidden_size)
    ok &= bool(jnp.allclose(out, ref, atol=1e-4, rtol=1e-4))

    # 3) 'mlp', Pallas kernel, default bf16 operands / f32 accumulation,
    #    auto tile (single step): loose numeric check.
    out = jax.block_until_ready(prefix_encoder_forward(
        params, batch_size, layer_id, prompt_func="mlp",
        use_kernel=True, **common))
    ok &= out.shape == (batch_size, prefix_length, hidden_size)
    ok &= bool(jnp.allclose(out, ref, atol=1e-1, rtol=1e-1))

    # 4) 'mlp', auto path: at this small H the size guard falls back to the
    #    fused jnp expression; check it matches the reference too.
    out = jax.block_until_ready(prefix_encoder_forward(
        params, batch_size, layer_id, prompt_func="mlp",
        compute_dtype=jnp.float32, **common))
    ok &= bool(jnp.allclose(out, ref, atol=1e-5, rtol=1e-5))

    if ok:
        print("KERNEL_OK")
</pallas_src>

<mosaic_0001>
module attributes {stable_mosaic.version = 11 : i64} {
  func.func @_prefix_mlp_kernel(%arg0: i32, %arg1: memref<1xi32, #tpu.memory_space<smem>>, %arg2: memref<16x256xf32, #tpu.memory_space<vmem>>, %arg3: memref<256x128xf32, #tpu.memory_space<vmem>>, %arg4: memref<1x128xf32, #tpu.memory_space<vmem>>, %arg5: memref<128x256xf32, #tpu.memory_space<vmem>>, %arg6: memref<1x256xf32, #tpu.memory_space<vmem>>, %arg7: memref<16x256xf32, #tpu.memory_space<vmem>>, %arg8: memref<16x256xf32, #tpu.memory_space<vmem>>) attributes {dimension_semantics = [#tpu.dimension_semantics<arbitrary>], iteration_bounds = array<i64: 2>, scalar_prefetch = 1 : i64, scratch_operands = 1 : i64, tpu.core_type = #tpu.core_type<tc>, window_params = [{transform_indices = @transform_0, window_bounds = array<i64: 16, 256>}, {transform_indices = @transform_1, window_bounds = array<i64: 256, 128>}, {transform_indices = @transform_2, window_bounds = array<i64: 1, 128>}, {transform_indices = @transform_3, window_bounds = array<i64: 128, 256>}, {pipeline_mode = #tpu.pipeline_mode<synchronous>, transform_indices = @transform_4, window_bounds = array<i64: 1, 256>}, {pipeline_mode = #tpu.pipeline_mode<synchronous>, transform_indices = @transform_5, window_bounds = array<i64: 16, 256>}]} {
    %c0_i32 = arith.constant 0 : i32
    %0 = arith.cmpi eq, %arg0, %c0_i32 : i32
    %1 = arith.extui %0 : i1 to i32
    %c0_i32_0 = arith.constant 0 : i32
    %2 = arith.cmpi ne, %1, %c0_i32_0 : i32
    scf.if %2 {
      %cst_15 = arith.constant 0.000000e+00 : f32
      %19 = vector.broadcast %cst_15 : f32 to vector<16x256xf32>
      %c0_16 = arith.constant 0 : index
      %c0_17 = arith.constant 0 : index
      %20 = vector.load %arg8[%c0_16, %c0_17] : memref<16x256xf32, #tpu.memory_space<vmem>>, vector<16x256xf32>
      tpu.vector_store %arg8[%c0_16, %c0_17], %19 {strides = array<i32>} : memref<16x256xf32, #tpu.memory_space<vmem>>, vector<16x256xf32>,
    } else {
    }
    %c0 = arith.constant 0 : index
    %c0_1 = arith.constant 0 : index
    %3 = vector.load %arg2[%c0, %c0_1] : memref<16x256xf32, #tpu.memory_space<vmem>>, vector<16x256xf32>
    %c0_2 = arith.constant 0 : index
    %c0_3 = arith.constant 0 : index
    %4 = vector.load %arg3[%c0_2, %c0_3] : memref<256x128xf32, #tpu.memory_space<vmem>>, vector<256x128xf32>
    %cst = arith.constant dense<0.000000e+00> : vector<16x128xf32>
    %5 = tpu.matmul %3, %4, %cst {dimension_numbers = #tpu.dot_dimension_numbers<[1], [0], [0], [1], [0, 0, 1, 1], [], []>, precision = #tpu.contract_precision<fp32>} : vector<16x256xf32>, vector<256x128xf32>, vector<16x128xf32> -> vector<16x128xf32>
    %c0_4 = arith.constant 0 : index
    %c0_5 = arith.constant 0 : index
    %6 = vector.load %arg4[%c0_4, %c0_5] : memref<1x128xf32, #tpu.memory_space<vmem>>, vector<1x128xf32>
    %7 = vector.broadcast %6 : vector<1x128xf32> to vector<16x128xf32>
    %8 = arith.addf %5, %7 : vector<16x128xf32>
    %cst_6 = arith.constant 0.000000e+00 : f32
    %9 = vector.broadcast %cst_6 : f32 to vector<16x128xf32>
    %10 = arith.maximumf %8, %9 : vector<16x128xf32>
    %c0_7 = arith.constant 0 : index
    %c0_8 = arith.constant 0 : index
    %11 = vector.load %arg8[%c0_7, %c0_8] : memref<16x256xf32, #tpu.memory_space<vmem>>, vector<16x256xf32>
    %c0_9 = arith.constant 0 : index
    %c0_10 = arith.constant 0 : index
    %12 = vector.load %arg5[%c0_9, %c0_10] : memref<128x256xf32, #tpu.memory_space<vmem>>, vector<128x256xf32>
    %cst_11 = arith.constant dense<0.000000e+00> : vector<16x256xf32>
    %13 = tpu.matmul %10, %12, %cst_11 {dimension_numbers = #tpu.dot_dimension_numbers<[1], [0], [0], [1], [0, 0, 1, 1], [], []>, precision = #tpu.contract_precision<fp32>} : vector<16x128xf32>, vector<128x256xf32>, vector<16x256xf32> -> vector<16x256xf32>
    %14 = arith.addf %11, %13 : vector<16x256xf32>
    %c0_12 = arith.constant 0 : index
    %c0_13 = arith.constant 0 : index
    %15 = vector.load %arg8[%c0_12, %c0_13] : memref<16x256xf32, #tpu.memory_space<vmem>>, vector<16x256xf32>
    tpu.vector_store %arg8[%c0_12, %c0_13], %14 {strides = array<i32>} : memref<16x256xf32, #tpu.memory_space<vmem>>, vector<16x256xf32>,
    %c1_i32 = arith.constant 1 : i32
    %16 = arith.cmpi eq, %arg0, %c1_i32 : i32
    %17 = arith.extui %16 : i1 to i32
    %c0_i32_14 = arith.constant 0 : i32
    %18 = arith.cmpi ne, %17, %c0_i32_14 : i32
    scf.if %18 {
      %c0_15 = arith.constant 0 : index
      %c0_16 = arith.constant 0 : index
      %19 = vector.load %arg8[%c0_15, %c0_16] : memref<16x256xf32, #tpu.memory_space<vmem>>, vector<16x256xf32>
      %c0_17 = arith.constant 0 : index
      %c0_18 = arith.constant 0 : index
      %20 = vector.load %arg6[%c0_17, %c0_18] : memref<1x256xf32, #tpu.memory_space<vmem>>, vector<1x256xf32>
      %21 = vector.broadcast %20 : vector<1x256xf32> to vector<16x256xf32>
      %22 = arith.addf %19, %21 : vector<16x256xf32>
      %c0_19 = arith.constant 0 : index
      %c0_20 = arith.constant 0 : index
      %23 = vector.load %arg7[%c0_19, %c0_20] : memref<16x256xf32, #tpu.memory_space<vmem>>, vector<16x256xf32>
      tpu.vector_store %arg7[%c0_19, %c0_20], %22 {strides = array<i32>} : memref<16x256xf32, #tpu.memory_space<vmem>>, vector<16x256xf32>,
    } else {
    }
    return
  }
  func.func @transform_0(%arg0: i32, %arg1: memref<1xi32, #tpu.memory_space<smem>>) -> (i32, i32) {
    %c0 = arith.constant 0 : index
    %0 = memref.load %arg1[%c0] : memref<1xi32, #tpu.memory_space<smem>>
    %c0_i32 = arith.constant 0 : i32
    %c0_i32_0 = arith.constant 0 : i32
    return %c0_i32, %0 : i32, i32
  }
  func.func @transform_1(%arg0: i32, %arg1: memref<1xi32, #tpu.memory_space<smem>>) -> (i32, i32) {
    %c0_i32 = arith.constant 0 : i32
    %c0_i32_0 = arith.constant 0 : i32
    return %c0_i32, %arg0 : i32, i32
  }
  func.func @transform_2(%arg0: i32, %arg1: memref<1xi32, #tpu.memory_space<smem>>) -> (i32, i32) {
    %c0_i32 = arith.constant 0 : i32
    %c0_i32_0 = arith.constant 0 : i32
    return %c0_i32, %arg0 : i32, i32
  }
  func.func @transform_3(%arg0: i32, %arg1: memref<1xi32, #tpu.memory_space<smem>>) -> (i32, i32) {
    %c0_i32 = arith.constant 0 : i32
    %c0_i32_0 = arith.constant 0 : i32
    return %arg0, %c0_i32 : i32, i32
  }
  func.func @transform_4(%arg0: i32, %arg1: memref<1xi32, #tpu.memory_space<smem>>) -> (i32, i32) {
    %c0_i32 = arith.constant 0 : i32
    %c0_i32_0 = arith.constant 0 : i32
    %c0_i32_1 = arith.constant 0 : i32
    return %c0_i32, %c0_i32_0 : i32, i32
  }
  func.func @transform_5(%arg0: i32, %arg1: memref<1xi32, #tpu.memory_space<smem>>) -> (i32, i32) {
    %c0_i32 = arith.constant 0 : i32
    %c0_i32_0 = arith.constant 0 : i32
    %c0_i32_1 = arith.constant 0 : i32
    return %c0_i32, %c0_i32_0 : i32, i32
  }
}

</mosaic_0001>

<llo_original>
// kernel: tpu_custom_call.1
$region0: #{tpu_custom_call.1}
  #allocation0 [shape = 'u32[]', space=smem, size = 0x4, offset = 0x4, fixed_abs, tag = 'smem constant byte address 0x4 - core index']
  #allocation1 [shape = 'u32[144,128]{1,0:T(1,128)}', space=vmem, size = 0x12000, scoped, tag = 'internal scratch']
  #allocation2 [shape = 'f32[16,256]{1,0:T(8,128)}', space=vmem, size = 0x4000, scoped, tag = 'scratch operand']
  #allocation3 [shape = 's32[1]{0}', space=sflag, size = 0x4, scoped, tag = 'scoped memory for tpu_custom_call.1']
  #allocation4 [shape = 's32[1]{0:T(128)S(6)}', space=smem, size = 0x200, scoped, tag = 'prefetched SMEM operand 0']
  %s0 = inlined_call_operand.<no memory space> [shape: s32[1], index: 0, kind: input, shape index: {}]
  %s1 = inlined_call_operand.hbm [shape: f32[16,512], index: 1, kind: input, shape index: {}]
  %s2 = inlined_call_operand.hbm [shape: f32[256,256], index: 2, kind: input, shape index: {}]
  %s3 = inlined_call_operand.vmem [shape: f32[1,256], index: 3, kind: input, shape index: {}]
  %s4 = inlined_call_operand.hbm [shape: f32[256,256], index: 4, kind: input, shape index: {}]
  %s5 = inlined_call_operand.vmem [shape: f32[1,256], index: 5, kind: input, shape index: {}]
  %s6 = inlined_call_operand.hbm [shape: f32[16,256], index: 6, kind: output, shape index: {}]
  %s7 = sld [smem:[#allocation0]]
  $region73: #{tpu_custom_call.1} parent=0
    _
  %s9 = ssub.s32 1, %s7
  %s10 = scalar_select 0, %s9, %s7
  %11 = sst [smem:[#allocation4]] %s0
  $region1: #{tpu_custom_call.1} parent=0
    #allocation5 [shape = 'u8[16384]{0}', space=vmem, size = 0x4000, scoped, tag = 'input window, operand 1, single buffered']
    #allocation6 [shape = 's32[2]{0}', space=sflag, size = 0x8, scoped, tag = 'scoped memory for tpu_custom_call.1']
    #allocation7 [shape = 's32[2]{0}', space=sflag, size = 0x8, scoped, tag = 'scoped memory for tpu_custom_call.1']
    #allocation8 [shape = 'u8[262144]{0}', space=vmem, size = 0x40000, scoped, tag = 'input window, operand 2']
    #allocation9 [shape = 's32[2]{0}', space=sflag, size = 0x8, scoped, tag = 'scoped memory for tpu_custom_call.1']
    #allocation10 [shape = 'u8[262144]{0}', space=vmem, size = 0x40000, scoped, tag = 'input window, operand 4']
    #allocation11 [shape = 'u8[16384]{0}', space=vmem, size = 0x4000, scoped, tag = 'output window, operand 0, single buffered']
    %12 = vsyncpa [#allocation6], 0
    %13 = vsyncpa [#allocation9], 0
    %s14 = scalar_lea.sflag [#allocation9], 1
    %15 = vsyncpa %s14, 0
    %16 = vsyncpa [#allocation7], 0
    loop: start=0, step=1, limit=4
    $region2: #{tpu_custom_call.1} parent=1 // loop_pre_header
      _
    $region3: #{tpu_custom_call.1} parent=1 // loop_header
      %s18 = sphi 0, %s22
      %p19 = scmp.ge.s32.totalorder %s18, 4
      %s30 = sphi 0, %s32
      %s33 = sphi 0, %s30
      %s34 = sphi 0, %s33
      %s50 = sphi 0, %s34
      %s56 = sphi 0, %s58
      %s59 = sphi 0, %s56
      %s60 = sphi 0, %s59
      %s76 = sphi 0, %s60
      %s82 = sphi 0, %s84
      %s85 = sphi 0, %s82
      %s86 = sphi 0, %s85
      %s102 = sphi 0, %s86
      %s108 = sphi 0, %s110
      %s111 = sphi 0, %s108
      %s112 = sphi 0, %s111
      %s128 = sphi 0, %s112
      %s132 = sphi 0, %s132
      %s134 = sphi 0, %s132
      %s135 = sphi 0, %s134
      %s149 = sphi 0, %s135
      %s153 = sphi 0, %s153
      %s155 = sphi 0, %s153
      %s156 = sphi 0, %s155
      %s170 = sphi 0, %s156
    $region4: #{tpu_custom_call.1} parent=1 // loop_header_branch
      %21 = sbr.rel (%p19) target = $region8
    $region5: #{tpu_custom_call.1} parent=1 // loop_body
      %s23 = ssub.s32 %s18, 1
      %s24 = ssub.s32 %s18, 2
      %s25 = sadd.s32 %s18, 1
      %s26 = sld [smem:[#allocation4]]
      %s27 = sld [smem:[#allocation4]]
      %s28 = ssub.s32 %s26, %s27
      %p29 = scmp.eq.s32.totalorder %s28, 0
      %s31 = sadd.s32 %s30, 1
      %s32 = scalar_select %p29, %s30, %s31
      %p35 = pneg %p29
      %p36 = scmp.eq.s32.totalorder %s18, 1
      %p37 = por %p35, %p36
      %p38 = scmp.ne.s32.totalorder %s30, %s33
      %p39 = scmp.eq.s32.totalorder %s18, 0
      %p40 = por %p38, %p39
      %p41 = scmp.ne.s32.totalorder %s30, %s33
      %p42 = scmp.eq.s32.totalorder %s23, 1
      %p43 = por %p41, %p42
      %p44 = scmp.ne.s32.totalorder %s33, %s34
      %p45 = scmp.eq.s32.totalorder %s23, 0
      %p46 = por %p44, %p45
      %p47 = scmp.ne.s32.totalorder %s33, %s34
      %p48 = scmp.eq.s32.totalorder %s24, 1
      %p49 = por %p47, %p48
      %p51 = scmp.ne.s32.totalorder %s34, %s50
      %p52 = scmp.eq.s32.totalorder %s24, 0
      %p53 = por %p51, %p52
      %s54 = ssub.s32 %s18, %s25
      %p55 = scmp.eq.s32.totalorder %s54, 0
      %s57 = sadd.s32 %s56, 1
      %s58 = scalar_select %p55, %s56, %s57
      %p61 = pneg %p55
      %p62 = scmp.eq.s32.totalorder %s18, 1
      %p63 = por %p61, %p62
      %p64 = scmp.ne.s32.totalorder %s56, %s59
      %p65 = scmp.eq.s32.totalorder %s18, 0
      %p66 = por %p64, %p65
      %p67 = scmp.ne.s32.totalorder %s56, %s59
      %p68 = scmp.eq.s32.totalorder %s23, 1
      %p69 = por %p67, %p68
      %p70 = scmp.ne.s32.totalorder %s59, %s60
      %p71 = scmp.eq.s32.totalorder %s23, 0
      %p72 = por %p70, %p71
      %p73 = scmp.ne.s32.totalorder %s59, %s60
      %p74 = scmp.eq.s32.totalorder %s24, 1
      %p75 = por %p73, %p74
      %p77 = scmp.ne.s32.totalorder %s60, %s76
      %p78 = scmp.eq.s32.totalorder %s24, 0
      %p79 = por %p77, %p78
      %s80 = ssub.s32 %s18, %s25
      %p81 = scmp.eq.s32.totalorder %s80, 0
      %s83 = sadd.s32 %s82, 1
      %s84 = scalar_select %p81, %s82, %s83
      %p87 = pneg %p81
      %p88 = scmp.eq.s32.totalorder %s18, 1
      %p89 = por %p87, %p88
      %p90 = scmp.ne.s32.totalorder %s82, %s85
      %p91 = scmp.eq.s32.totalorder %s18, 0
      %p92 = por %p90, %p91
      %p93 = scmp.ne.s32.totalorder %s82, %s85
      %p94 = scmp.eq.s32.totalorder %s23, 1
      %p95 = por %p93, %p94
      %p96 = scmp.ne.s32.totalorder %s85, %s86
      %p97 = scmp.eq.s32.totalorder %s23, 0
      %p98 = por %p96, %p97
      %p99 = scmp.ne.s32.totalorder %s85, %s86
      %p100 = scmp.eq.s32.totalorder %s24, 1
      %p101 = por %p99, %p100
      %p103 = scmp.ne.s32.totalorder %s86, %s102
      %p104 = scmp.eq.s32.totalorder %s24, 0
      %p105 = por %p103, %p104
      %s106 = ssub.s32 %s18, %s25
      %p107 = scmp.eq.s32.totalorder %s106, 0
      %s109 = sadd.s32 %s108, 1
      %s110 = scalar_select %p107, %s108, %s109
      %p113 = pneg %p107
      %p114 = scmp.eq.s32.totalorder %s18, 1
      %p115 = por %p113, %p114
      %p116 = scmp.ne.s32.totalorder %s108, %s111
      %p117 = scmp.eq.s32.totalorder %s18, 0
      %p118 = por %p116, %p117
      %p119 = scmp.ne.s32.totalorder %s108, %s111
      %p120 = scmp.eq.s32.totalorder %s23, 1
      %p121 = por %p119, %p120
      %p122 = scmp.ne.s32.totalorder %s111, %s112
      %p123 = scmp.eq.s32.totalorder %s23, 0
      %p124 = por %p122, %p123
      %p125 = scmp.ne.s32.totalorder %s111, %s112
      %p126 = scmp.eq.s32.totalorder %s24, 1
      %p127 = por %p125, %p126
      %p129 = scmp.ne.s32.totalorder %s112, %s128
      %p130 = scmp.eq.s32.totalorder %s24, 0
      %p131 = por %p129, %p130
      %s133 = sadd.s32 %s132, 1
      %p136 = scmp.eq.s32.totalorder %s18, 1
      %p137 = scmp.ne.s32.totalorder %s132, %s134
      %p138 = scmp.eq.s32.totalorder %s18, 0
      %p139 = por %p137, %p138
      %p140 = scmp.ne.s32.totalorder %s132, %s134
      %p141 = scmp.eq.s32.totalorder %s23, 1
      %p142 = por %p140, %p141
      %p143 = scmp.ne.s32.totalorder %s134, %s135
      %p144 = scmp.eq.s32.totalorder %s23, 0
      %p145 = por %p143, %p144
      %p146 = scmp.ne.s32.totalorder %s134, %s135
      %p147 = scmp.eq.s32.totalorder %s24, 1
      %p148 = por %p146, %p147
      %p150 = scmp.ne.s32.totalorder %s135, %s149
      %p151 = scmp.eq.s32.totalorder %s24, 0
      %p152 = por %p150, %p151
      %s154 = sadd.s32 %s153, 1
      %p157 = scmp.eq.s32.totalorder %s18, 1
      %p158 = scmp.ne.s32.totalorder %s153, %s155
      %p159 = scmp.eq.s32.totalorder %s18, 0
      %p160 = por %p158, %p159
      %p161 = scmp.ne.s32.totalorder %s153, %s155
      %p162 = scmp.eq.s32.totalorder %s23, 1
      %p163 = por %p161, %p162
      %p164 = scmp.ne.s32.totalorder %s155, %s156
      %p165 = scmp.eq.s32.totalorder %s23, 0
      %p166 = por %p164, %p165
      %p167 = scmp.ne.s32.totalorder %s155, %s156
      %p168 = scmp.eq.s32.totalorder %s24, 1
      %p169 = por %p167, %p168
      %p171 = scmp.ne.s32.totalorder %s156, %s170
      %p172 = scmp.eq.s32.totalorder %s24, 0
      %p173 = por %p171, %p172
      %p174 = scmp.le.s32.totalorder 1, %s18
      %p175 = scmp.lt.s32.totalorder %s18, 3
      %p176 = pnand %p174, %p175
      %p177 = pneg %p176
      // Predicated region
      $region9: #{tpu_custom_call.1} parent=5 // pred_check
        _
      $region10: #{tpu_custom_call.1} parent=5 // pred_check_branch
        %179 = sbr.rel (%p176) target = $region12
      $region11: #{tpu_custom_call.1} parent=5 // pred_region
        %s180 = ssub.s32 %s18, 1
        // Predicated region
        $region13: #{tpu_custom_call.1} parent=11 // pred_check
          %p181 = pneg %p46
        $region14: #{tpu_custom_call.1} parent=11 // pred_check_branch
          %183 = sbr.rel (%p181) target = $region16
        $region15: #{tpu_custom_call.1} parent=11 // pred_region
          %s184 = sld [smem:[#allocation4]]
          %s185 = smul.u32 2, %s184
          %s187 = ssub.s32 512, 512
          %188 = vsyncadd [#allocation6], %s187
          %s189 = smul.addr %s185, 128
          %s190 = scalar_lea.hbm %s1, %s189
          %s191 = sshll.u32 [#allocation5], 4
          %s192 = int_to_ptr.vmem [resolvable:$true] %s191
          %197 = dma.hbm_to_vmem [thread:$0]  %s190, 512, %s192, [#allocation6], 512, 256, 16
        $region16: #{tpu_custom_call.1} parent=11 // pred_fallthru
          _
        // Predicated region
        $region17: #{tpu_custom_call.1} parent=11 // pred_check
          %p198 = pneg %p145
        $region18: #{tpu_custom_call.1} parent=11 // pred_check_branch
          %200 = sbr.rel (%p198) target = $region20
        $region19: #{tpu_custom_call.1} parent=11 // pred_region
          _
        $region20: #{tpu_custom_call.1} parent=11 // pred_fallthru
          _
      $region12: #{tpu_custom_call.1} parent=5 // pred_fallthru
        _
      %p201 = scmp.lt.s32.totalorder %s18, 2
      // Predicated region
      $region21: #{tpu_custom_call.1} parent=5 // pred_check
        %p202 = pneg %p201
      $region22: #{tpu_custom_call.1} parent=5 // pred_check_branch
        %204 = sbr.rel (%p202) target = $region24
      $region23: #{tpu_custom_call.1} parent=5 // pred_region
        // Predicated region
        $region25: #{tpu_custom_call.1} parent=23 // pred_check
          %p205 = pneg %p66
        $region26: #{tpu_custom_call.1} parent=23 // pred_check_branch
          %207 = sbr.rel (%p205) target = $region28
        $region27: #{tpu_custom_call.1} parent=23 // pred_region
          %s208 = sand.u32 %s18, 1
          %s209 = scalar_lea.sflag [#allocation9], %s208
          %s210 = sand.u32 %s56, 1
          %s211 = smul.addr %s210, 256
          %s212 = scalar_lea.vmem [#allocation8], %s211
          %s214 = ssub.s32 4096, 4096
          %215 = vsyncadd %s209, %s214
          %s216 = smul.addr %s18, 128
          %s217 = scalar_lea.hbm %s2, %s216
          %s218 = sshll.u32 %s212, 4
          %s219 = int_to_ptr.vmem [resolvable:$true] %s218
          %224 = dma.hbm_to_vmem [thread:$0]  %s217, 4096, %s219, %s209, 256, 128, 8
        $region28: #{tpu_custom_call.1} parent=23 // pred_fallthru
          _
        // Predicated region
        $region29: #{tpu_custom_call.1} parent=23 // pred_check
          %p225 = pneg %p92
        $region30: #{tpu_custom_call.1} parent=23 // pred_check_branch
          %227 = sbr.rel (%p225) target = $region32
        $region31: #{tpu_custom_call.1} parent=23 // pred_region
          %p228 = scmp.lt.s32.totalorder %s18, 1
          %s229 = scalar_select %p228, %s18, 1
          %s230 = scalar_lea.vmem %s3, %s229
        $region32: #{tpu_custom_call.1} parent=23 // pred_fallthru
          _
        // Predicated region
        $region33: #{tpu_custom_call.1} parent=23 // pred_check
          %p231 = pneg %p118
        $region34: #{tpu_custom_call.1} parent=23 // pred_check_branch
          %233 = sbr.rel (%p231) target = $region36
        $region35: #{tpu_custom_call.1} parent=23 // pred_region
          %s234 = sand.u32 %s18, 1
          %s235 = scalar_lea.sflag [#allocation9], %s234
          %s236 = sand.u32 %s108, 1
          %s237 = smul.addr %s236, 256
          %s238 = scalar_lea.vmem [#allocation10], %s237
          %s239 = smul.u32 16, %s18
          %s241 = ssub.s32 4096, 4096
          %242 = vsyncadd %s235, %s241
          %s243 = smul.addr %s239, 2
          %s244 = smul.addr %s243, 128
          %s245 = scalar_lea.hbm %s4, %s244
          %s246 = sshll.u32 %s238, 4
          %s247 = int_to_ptr.vmem [resolvable:$true] %s246
          %252 = dma.hbm_to_vmem [thread:$0]  %s245, 4096, %s247, %s235, 256, 256, 16
        $region36: #{tpu_custom_call.1} parent=23 // pred_fallthru
          _
      $region24: #{tpu_custom_call.1} parent=5 // pred_fallthru
        _
      %p253 = scmp.le.s32.totalorder 1, %s18
      %p254 = scmp.lt.s32.totalorder %s18, 3
      %p255 = pnand %p253, %p254
      %p256 = pneg %p255
      // Predicated region
      $region37: #{tpu_custom_call.1} parent=5 // pred_check
        _
      $region38: #{tpu_custom_call.1} parent=5 // pred_check_branch
        %258 = sbr.rel (%p255) target = $region40
      $region39: #{tpu_custom_call.1} parent=5 // pred_region
        %s259 = ssub.s32 %s18, 1
        // Predicated region
        $region41: #{tpu_custom_call.1} parent=39 // pred_check
          %p260 = pneg %p46
        $region42: #{tpu_custom_call.1} parent=39 // pred_check_branch
          %262 = sbr.rel (%p260) target = $region44
        $region43: #{tpu_custom_call.1} parent=39 // pred_region
          %263 = dma.done [#allocation6], 512
        $region44: #{tpu_custom_call.1} parent=39 // pred_fallthru
          _
        %s264 = sand.u32 %s23, 1
        %s265 = scalar_lea.sflag [#allocation9], %s264
        %s266 = sand.u32 %s59, 1
        %s267 = smul.addr %s266, 256
        %s268 = scalar_lea.vmem [#allocation8], %s267
        // Predicated region
        $region45: #{tpu_custom_call.1} parent=39 // pred_check
          %p269 = pneg %p72
        $region46: #{tpu_custom_call.1} parent=39 // pred_check_branch
          %271 = sbr.rel (%p269) target = $region48
        $region47: #{tpu_custom_call.1} parent=39 // pred_region
          %272 = dma.done %s265, 4096
        $region48: #{tpu_custom_call.1} parent=39 // pred_fallthru
          _
        %s273 = sand.u32 %s23, 1
        %s274 = scalar_lea.sflag [#allocation9], %s273
        %s275 = sand.u32 %s111, 1
        %s276 = smul.addr %s275, 256
        %s277 = scalar_lea.vmem [#allocation10], %s276
        // Predicated region
        $region49: #{tpu_custom_call.1} parent=39 // pred_check
          %p278 = pneg %p124
        $region50: #{tpu_custom_call.1} parent=39 // pred_check_branch
          %280 = sbr.rel (%p278) target = $region52
        $region51: #{tpu_custom_call.1} parent=39 // pred_region
          %281 = dma.done %s274, 4096
        $region52: #{tpu_custom_call.1} parent=39 // pred_fallthru
          _
        %p282 = pneg %p46
        %p283 = pneg %p43
        %s284 = sand.u32 %s23, 1
        %s285 = scalar_lea.sflag [#allocation9], %s284
        %s286 = sand.u32 %s59, 1
        %s287 = smul.addr %s286, 256
        %s288 = scalar_lea.vmem [#allocation8], %s287
        %p289 = pneg %p72
        %p290 = pneg %p69
        %p291 = scmp.lt.s32.totalorder %s23, 1
        %s292 = scalar_select %p291, %s23, 1
        %s293 = scalar_lea.vmem %s3, %s292
        %p294 = pneg %p98
        %p295 = pneg %p95
        %s296 = sand.u32 %s23, 1
        %s297 = scalar_lea.sflag [#allocation9], %s296
        %s298 = sand.u32 %s111, 1
        %s299 = smul.addr %s298, 256
        %s300 = scalar_lea.vmem [#allocation10], %s299
        %p301 = pneg %p124
        %p302 = pneg %p121
        %p303 = pneg %p145
        %p304 = pneg %p142
        %p305 = pneg %p166
        %p306 = pneg %p163
        %s307 = sld [smem:[#allocation4]]
        %s308 = smul.u32 2, %s307
        %p309 = scmp.lt.s32.totalorder %s23, 1
        %s310 = scalar_select %p309, %s23, 1
        %s311 = scalar_lea.vmem %s3, %s310
        %s312 = smul.u32 16, %s23
        %p313 = scmp.eq.s32.totalorder %s23, 0
        // Predicated region
        $region53: #{tpu_custom_call.1} parent=39 // pred_check
          %p314 = pneg %p313
        $region54: #{tpu_custom_call.1} parent=39 // pred_check_branch
          %316 = sbr.rel (%p314) target = $region56
        $region55: #{tpu_custom_call.1} parent=39 // pred_region
          %317 = vst [vmem:[#allocation2] sm:$0xff] 0.0
          %318 = vst [vmem:[#allocation2 + $0x8] sm:$0xff] 0.0
          %319 = vst [vmem:[#allocation2 + $0x10] sm:$0xff] 0.0
          %320 = vst [vmem:[#allocation2 + $0x18] sm:$0xff] 0.0
        $region56: #{tpu_custom_call.1} parent=39 // pred_fallthru
          _
        %v321 = vld [vmem:[#allocation5] sm:$0xff]
        %v322 = vld [vmem:[#allocation5 + $0x8] sm:$0xff]
        %v323 = vld [vmem:[#allocation5 + $0x10] sm:$0xff]
        %v324 = vld [vmem:[#allocation5 + $0x18] sm:$0xff]
        %v325 = vld [vmem:[%s268] sm:$0xff]
        %v326 = vld [vmem:[%s268 + $0x8] sm:$0xff]
        %v327 = vld [vmem:[%s268 + $0x10] sm:$0xff]
        %v328 = vld [vmem:[%s268 + $0x18] sm:$0xff]
        %v329 = vld [vmem:[%s268 + $0x20] sm:$0xff]
        %v330 = vld [vmem:[%s268 + $0x28] sm:$0xff]
        %v331 = vld [vmem:[%s268 + $0x30] sm:$0xff]
        %v332 = vld [vmem:[%s268 + $0x38] sm:$0xff]
        %v333 = vld [vmem:[%s268 + $0x40] sm:$0xff]
        %v334 = vld [vmem:[%s268 + $0x48] sm:$0xff]
        %v335 = vld [vmem:[%s268 + $0x50] sm:$0xff]
        %v336 = vld [vmem:[%s268 + $0x58] sm:$0xff]
        %v337 = vld [vmem:[%s268 + $0x60] sm:$0xff]
        %v338 = vld [vmem:[%s268 + $0x68] sm:$0xff]
        %v339 = vld [vmem:[%s268 + $0x70] sm:$0xff]
        %v340 = vld [vmem:[%s268 + $0x78] sm:$0xff]
        %v341 = vld [vmem:[%s268 + $0x80] sm:$0xff]
        %v342 = vld [vmem:[%s268 + $0x88] sm:$0xff]
        %v343 = vld [vmem:[%s268 + $0x90] sm:$0xff]
        %v344 = vld [vmem:[%s268 + $0x98] sm:$0xff]
        %v345 = vld [vmem:[%s268 + $0xa0] sm:$0xff]
        %v346 = vld [vmem:[%s268 + $0xa8] sm:$0xff]
        %v347 = vld [vmem:[%s268 + $0xb0] sm:$0xff]
        %v348 = vld [vmem:[%s268 + $0xb8] sm:$0xff]
        %v349 = vld [vmem:[%s268 + $0xc0] sm:$0xff]
        %v350 = vld [vmem:[%s268 + $0xc8] sm:$0xff]
        %v351 = vld [vmem:[%s268 + $0xd0] sm:$0xff]
        %v352 = vld [vmem:[%s268 + $0xd8] sm:$0xff]
        %v353 = vld [vmem:[%s268 + $0xe0] sm:$0xff]
        %v354 = vld [vmem:[%s268 + $0xe8] sm:$0xff]
        %v355 = vld [vmem:[%s268 + $0xf0] sm:$0xff]
        %v356 = vld [vmem:[%s268 + $0xf8] sm:$0xff]
        %v357 = vld [vmem:[%s311] sm:$0x1]
        %v359 = vlaneseq
        %v360 = vshrl.u32 %v359, 7
        %v361 = vsub.s32 0, %v360
        %v362 = vrot.slane %v357, %v361
        %364 = vmatprep.subr.mxu0 0.0
        %v365 = vand.u32 %v325, 4294901760
        %366 = vmatpush1.msra.mxu0 %v365
        %367 = vmatprep.subr.mxu0 0.0
        %v368 = vand.u32 %v326, 4294901760
        %369 = vmatpush1.msra.mxu0 %v368
        %370 = vmatprep.subr.mxu0 0.0
        %v371 = vand.u32 %v327, 4294901760
        %372 = vmatpush1.msra.mxu0 %v371
        %373 = vmatprep.subr.mxu0 0.0
        %v374 = vand.u32 %v328, 4294901760
        %375 = vmatpush1.msra.mxu0 %v374
        %376 = vmatprep.subr.mxu0 0.0
        %v377 = vand.u32 %v329, 4294901760
        %378 = vmatpush1.msra.mxu0 %v377
        %379 = vmatprep.subr.mxu0 0.0
        %v380 = vand.u32 %v330, 4294901760
        %381 = vmatpush1.msra.mxu0 %v380
        %382 = vmatprep.subr.mxu0 0.0
        %v383 = vand.u32 %v331, 4294901760
        %384 = vmatpush1.msra.mxu0 %v383
        %385 = vmatprep.subr.mxu0 0.0
        %v386 = vand.u32 %v332, 4294901760
        %387 = vmatpush1.msra.mxu0 %v386
        %388 = vmatprep.subr.mxu0 0.0
        %v389 = vand.u32 %v333, 4294901760
        %390 = vmatpush1.msra.mxu0 %v389
        %391 = vmatprep.subr.mxu0 0.0
        %v392 = vand.u32 %v334, 4294901760
        %393 = vmatpush1.msra.mxu0 %v392
        %394 = vmatprep.subr.mxu0 0.0
        %v395 = vand.u32 %v335, 4294901760
        %396 = vmatpush1.msra.mxu0 %v395
        %397 = vmatprep.subr.mxu0 0.0
        %v398 = vand.u32 %v336, 4294901760
        %399 = vmatpush1.msra.mxu0 %v398
        %400 = vmatprep.subr.mxu0 0.0
        %v401 = vand.u32 %v337, 4294901760
        %402 = vmatpush1.msra.mxu0 %v401
        %403 = vmatprep.subr.mxu0 0.0
        %v404 = vand.u32 %v338, 4294901760
        %405 = vmatpush1.msra.mxu0 %v404
        %406 = vmatprep.subr.mxu0 0.0
        %v407 = vand.u32 %v339, 4294901760
        %408 = vmatpush1.msra.mxu0 %v407
        %409 = vmatprep.subr.mxu0 0.0
        %v410 = vand.u32 %v340, 4294901760
        %411 = vmatpush1.msra.mxu0 %v410
        %412 = vmatprep.subr.mxu0 0.0
        %v413 = vand.u32 %v341, 4294901760
        %414 = vmatpush1.msra.mxu0 %v413
        %415 = vmatprep.subr.mxu0 0.0
        %v416 = vand.u32 %v342, 4294901760
        %417 = vmatpush1.msra.mxu0 %v416
        %418 = vmatprep.subr.mxu0 0.0
        %v419 = vand.u32 %v343, 4294901760
        %420 = vmatpush1.msra.mxu0 %v419
        %421 = vmatprep.subr.mxu0 0.0
        %v422 = vand.u32 %v344, 4294901760
        %423 = vmatpush1.msra.mxu0 %v422
        %424 = vmatprep.subr.mxu0 0.0
        %v425 = vand.u32 %v345, 4294901760
        %426 = vmatpush1.msra.mxu0 %v425
        %427 = vmatprep.subr.mxu0 0.0
        %v428 = vand.u32 %v346, 4294901760
        %429 = vmatpush1.msra.mxu0 %v428
        %430 = vmatprep.subr.mxu0 0.0
        %v431 = vand.u32 %v347, 4294901760
        %432 = vmatpush1.msra.mxu0 %v431
        %433 = vmatprep.subr.mxu0 0.0
        %v434 = vand.u32 %v348, 4294901760
        %435 = vmatpush1.msra.mxu0 %v434
        %436 = vmatprep.subr.mxu0 0.0
        %v437 = vand.u32 %v349, 4294901760
        %438 = vmatpush1.msra.mxu0 %v437
        %439 = vmatprep.subr.mxu0 0.0
        %v440 = vand.u32 %v350, 4294901760
        %441 = vmatpush1.msra.mxu0 %v440
        %442 = vmatprep.subr.mxu0 0.0
        %v443 = vand.u32 %v351, 4294901760
        %444 = vmatpush1.msra.mxu0 %v443
        %445 = vmatprep.subr.mxu0 0.0
        %v446 = vand.u32 %v352, 4294901760
        %447 = vmatpush1.msra.mxu0 %v446
        %448 = vmatprep.subr.mxu0 0.0
        %v449 = vand.u32 %v353, 4294901760
        %450 = vmatpush1.msra.mxu0 %v449
        %451 = vmatprep.subr.mxu0 0.0
        %v452 = vand.u32 %v354, 4294901760
        %453 = vmatpush1.msra.mxu0 %v452
        %454 = vmatprep.subr.mxu0 0.0
        %v455 = vand.u32 %v355, 4294901760
        %456 = vmatpush1.msra.mxu0 %v455
        %457 = vmatprep.subr.mxu0 0.0
        %v458 = vand.u32 %v356, 4294901760
        %459 = vmatpush1.msra.mxu0 %v458
        %v460 = vand.u32 %v322, 4294901760
        %v461 = vsub.f32 %v322, %v460
        %v462 = vand.u32 %v461, 4294901760
        %v463 = vsub.f32 %v461, %v462
        %v464 = vand.u32 %v463, 4294901760
        %465 = vmatprep.mubr.f32.mxu0 %v464
        %v466 = vand.u32 %v321, 4294901760
        %v467 = vsub.f32 %v321, %v466
        %v468 = vand.u32 %v467, 4294901760
        %v469 = vsub.f32 %v467, %v468
        %v470 = vand.u32 %v469, 4294901760
        %471 = vmatmul.mubr.f32.gmra.mrb[0].mxu0 %v470
        %v472 = vpop.f32.mrb[0].mxu0
        %v473 = vadd.f32 %v362, %v472
        %v474 = vpop.f32.mrb[0].mxu0
        %v475 = vand.u32 %v324, 4294901760
        %v476 = vsub.f32 %v324, %v475
        %v477 = vand.u32 %v476, 4294901760
        %v478 = vsub.f32 %v476, %v477
        %v479 = vand.u32 %v478, 4294901760
        %480 = vmatprep.mubr.f32.mxu0 %v479
        %v481 = vand.u32 %v323, 4294901760
        %v482 = vsub.f32 %v323, %v481
        %v483 = vand.u32 %v482, 4294901760
        %v484 = vsub.f32 %v482, %v483
        %v485 = vand.u32 %v484, 4294901760
        %486 = vmatmul.mubr.f32.gmra.mrb[0].mxu0 %v485
        %v487 = vpop.f32.mrb[0].mxu0
        %v488 = vadd.f32 %v362, %v487
        %v489 = vpop.f32.mrb[0].mxu0
        %490 = vdwg.mxu0
        %491 = vmatprep.subr.mxu0 0.0
        %v492 = vand.u32 %v325, 4294901760
        %v493 = vsub.f32 %v325, %v492
        %v494 = vand.u32 %v493, 4294901760
        %v495 = vsub.f32 %v493, %v494
        %v496 = vand.u32 %v495, 4294901760
        %497 = vmatpush1.msra.mxu0 %v496
        %498 = vmatprep.subr.mxu0 0.0
        %v499 = vand.u32 %v326, 4294901760
        %v500 = vsub.f32 %v326, %v499
        %v501 = vand.u32 %v500, 4294901760
        %v502 = vsub.f32 %v500, %v501
        %v503 = vand.u32 %v502, 4294901760
        %504 = vmatpush1.msra.mxu0 %v503
        %505 = vmatprep.subr.mxu0 0.0
        %v506 = vand.u32 %v327, 4294901760
        %v507 = vsub.f32 %v327, %v506
        %v508 = vand.u32 %v507, 4294901760
        %v509 = vsub.f32 %v507, %v508
        %v510 = vand.u32 %v509, 4294901760
        %511 = vmatpush1.msra.mxu0 %v510
        %512 = vmatprep.subr.mxu0 0.0
        %v513 = vand.u32 %v328, 4294901760
        %v514 = vsub.f32 %v328, %v513
        %v515 = vand.u32 %v514, 4294901760
        %v516 = vsub.f32 %v514, %v515
        %v517 = vand.u32 %v516, 4294901760
        %518 = vmatpush1.msra.mxu0 %v517
        %519 = vmatprep.subr.mxu0 0.0
        %v520 = vand.u32 %v329, 4294901760
        %v521 = vsub.f32 %v329, %v520
        %v522 = vand.u32 %v521, 4294901760
        %v523 = vsub.f32 %v521, %v522
        %v524 = vand.u32 %v523, 4294901760
        %525 = vmatpush1.msra.mxu0 %v524
        %526 = vmatprep.subr.mxu0 0.0
        %v527 = vand.u32 %v330, 4294901760
        %v528 = vsub.f32 %v330, %v527
        %v529 = vand.u32 %v528, 4294901760
        %v530 = vsub.f32 %v528, %v529
        %v531 = vand.u32 %v530, 4294901760
        %532 = vmatpush1.msra.mxu0 %v531
        %533 = vmatprep.subr.mxu0 0.0
        %v534 = vand.u32 %v331, 4294901760
        %v535 = vsub.f32 %v331, %v534
        %v536 = vand.u32 %v535, 4294901760
        %v537 = vsub.f32 %v535, %v536
        %v538 = vand.u32 %v537, 4294901760
        %539 = vmatpush1.msra.mxu0 %v538
        %540 = vmatprep.subr.mxu0 0.0
        %v541 = vand.u32 %v332, 4294901760
        %v542 = vsub.f32 %v332, %v541
        %v543 = vand.u32 %v542, 4294901760
        %v544 = vsub.f32 %v542, %v543
        %v545 = vand.u32 %v544, 4294901760
        %546 = vmatpush1.msra.mxu0 %v545
        %547 = vmatprep.subr.mxu0 0.0
        %v548 = vand.u32 %v333, 4294901760
        %v549 = vsub.f32 %v333, %v548
        %v550 = vand.u32 %v549, 4294901760
        %v551 = vsub.f32 %v549, %v550
        %v552 = vand.u32 %v551, 4294901760
        %553 = vmatpush1.msra.mxu0 %v552
        %554 = vmatprep.subr.mxu0 0.0
        %v555 = vand.u32 %v334, 4294901760
        %v556 = vsub.f32 %v334, %v555
        %v557 = vand.u32 %v556, 4294901760
        %v558 = vsub.f32 %v556, %v557
        %v559 = vand.u32 %v558, 4294901760
        %560 = vmatpush1.msra.mxu0 %v559
        %561 = vmatprep.subr.mxu0 0.0
        %v562 = vand.u32 %v335, 4294901760
        %v563 = vsub.f32 %v335, %v562
        %v564 = vand.u32 %v563, 4294901760
        %v565 = vsub.f32 %v563, %v564
        %v566 = vand.u32 %v565, 4294901760
        %567 = vmatpush1.msra.mxu0 %v566
        %568 = vmatprep.subr.mxu0 0.0
        %v569 = vand.u32 %v336, 4294901760
        %v570 = vsub.f32 %v336, %v569
        %v571 = vand.u32 %v570, 4294901760
        %v572 = vsub.f32 %v570, %v571
        %v573 = vand.u32 %v572, 4294901760
        %574 = vmatpush1.msra.mxu0 %v573
        %575 = vmatprep.subr.mxu0 0.0
        %v576 = vand.u32 %v337, 4294901760
        %v577 = vsub.f32 %v337, %v576
        %v578 = vand.u32 %v577, 4294901760
        %v579 = vsub.f32 %v577, %v578
        %v580 = vand.u32 %v579, 4294901760
        %581 = vmatpush1.msra.mxu0 %v580
        %582 = vmatprep.subr.mxu0 0.0
        %v583 = vand.u32 %v338, 4294901760
        %v584 = vsub.f32 %v338, %v583
        %v585 = vand.u32 %v584, 4294901760
        %v586 = vsub.f32 %v584, %v585
        %v587 = vand.u32 %v586, 4294901760
        %588 = vmatpush1.msra.mxu0 %v587
        %589 = vmatprep.subr.mxu0 0.0
        %v590 = vand.u32 %v339, 4294901760
        %v591 = vsub.f32 %v339, %v590
        %v592 = vand.u32 %v591, 4294901760
        %v593 = vsub.f32 %v591, %v592
        %v594 = vand.u32 %v593, 4294901760
        %595 = vmatpush1.msra.mxu0 %v594
        %596 = vmatprep.subr.mxu0 0.0
        %v597 = vand.u32 %v340, 4294901760
        %v598 = vsub.f32 %v340, %v597
        %v599 = vand.u32 %v598, 4294901760
        %v600 = vsub.f32 %v598, %v599
        %v601 = vand.u32 %v600, 4294901760
        %602 = vmatpush1.msra.mxu0 %v601
        %603 = vmatprep.subr.mxu0 0.0
        %v604 = vand.u32 %v341, 4294901760
        %v605 = vsub.f32 %v341, %v604
        %v606 = vand.u32 %v605, 4294901760
        %v607 = vsub.f32 %v605, %v606
        %v608 = vand.u32 %v607, 4294901760
        %609 = vmatpush1.msra.mxu0 %v608
        %610 = vmatprep.subr.mxu0 0.0
        %v611 = vand.u32 %v342, 4294901760
        %v612 = vsub.f32 %v342, %v611
        %v613 = vand.u32 %v612, 4294901760
        %v614 = vsub.f32 %v612, %v613
        %v615 = vand.u32 %v614, 4294901760
        %616 = vmatpush1.msra.mxu0 %v615
        %617 = vmatprep.subr.mxu0 0.0
        %v618 = vand.u32 %v343, 4294901760
        %v619 = vsub.f32 %v343, %v618
        %v620 = vand.u32 %v619, 4294901760
        %v621 = vsub.f32 %v619, %v620
        %v622 = vand.u32 %v621, 4294901760
        %623 = vmatpush1.msra.mxu0 %v622
        %624 = vmatprep.subr.mxu0 0.0
        %v625 = vand.u32 %v344, 4294901760
        %v626 = vsub.f32 %v344, %v625
        %v627 = vand.u32 %v626, 4294901760
        %v628 = vsub.f32 %v626, %v627
        %v629 = vand.u32 %v628, 4294901760
        %630 = vmatpush1.msra.mxu0 %v629
        %631 = vmatprep.subr.mxu0 0.0
        %v632 = vand.u32 %v345, 4294901760
        %v633 = vsub.f32 %v345, %v632
        %v634 = vand.u32 %v633, 4294901760
        %v635 = vsub.f32 %v633, %v634
        %v636 = vand.u32 %v635, 4294901760
        %637 = vmatpush1.msra.mxu0 %v636
        %638 = vmatprep.subr.mxu0 0.0
        %v639 = vand.u32 %v346, 4294901760
        %v640 = vsub.f32 %v346, %v639
        %v641 = vand.u32 %v640, 4294901760
        %v642 = vsub.f32 %v640, %v641
        %v643 = vand.u32 %v642, 4294901760
        %644 = vmatpush1.msra.mxu0 %v643
        %645 = vmatprep.subr.mxu0 0.0
        %v646 = vand.u32 %v347, 4294901760
        %v647 = vsub.f32 %v347, %v646
        %v648 = vand.u32 %v647, 4294901760
        %v649 = vsub.f32 %v647, %v648
        %v650 = vand.u32 %v649, 4294901760
        %651 = vmatpush1.msra.mxu0 %v650
        %652 = vmatprep.subr.mxu0 0.0
        %v653 = vand.u32 %v348, 4294901760
        %v654 = vsub.f32 %v348, %v653
        %v655 = vand.u32 %v654, 4294901760
        %v656 = vsub.f32 %v654, %v655
        %v657 = vand.u32 %v656, 4294901760
        %658 = vmatpush1.msra.mxu0 %v657
        %659 = vmatprep.subr.mxu0 0.0
        %v660 = vand.u32 %v349, 4294901760
        %v661 = vsub.f32 %v349, %v660
        %v662 = vand.u32 %v661, 4294901760
        %v663 = vsub.f32 %v661, %v662
        %v664 = vand.u32 %v663, 4294901760
        %665 = vmatpush1.msra.mxu0 %v664
        %666 = vmatprep.subr.mxu0 0.0
        %v667 = vand.u32 %v350, 4294901760
        %v668 = vsub.f32 %v350, %v667
        %v669 = vand.u32 %v668, 4294901760
        %v670 = vsub.f32 %v668, %v669
        %v671 = vand.u32 %v670, 4294901760
        %672 = vmatpush1.msra.mxu0 %v671
        %673 = vmatprep.subr.mxu0 0.0
        %v674 = vand.u32 %v351, 4294901760
        %v675 = vsub.f32 %v351, %v674
        %v676 = vand.u32 %v675, 4294901760
        %v677 = vsub.f32 %v675, %v676
        %v678 = vand.u32 %v677, 4294901760
        %679 = vmatpush1.msra.mxu0 %v678
        %680 = vmatprep.subr.mxu0 0.0
        %v681 = vand.u32 %v352, 4294901760
        %v682 = vsub.f32 %v352, %v681
        %v683 = vand.u32 %v682, 4294901760
        %v684 = vsub.f32 %v682, %v683
        %v685 = vand.u32 %v684, 4294901760
        %686 = vmatpush1.msra.mxu0 %v685
        %687 = vmatprep.subr.mxu0 0.0
        %v688 = vand.u32 %v353, 4294901760
        %v689 = vsub.f32 %v353, %v688
        %v690 = vand.u32 %v689, 4294901760
        %v691 = vsub.f32 %v689, %v690
        %v692 = vand.u32 %v691, 4294901760
        %693 = vmatpush1.msra.mxu0 %v692
        %694 = vmatprep.subr.mxu0 0.0
        %v695 = vand.u32 %v354, 4294901760
        %v696 = vsub.f32 %v354, %v695
        %v697 = vand.u32 %v696, 4294901760
        %v698 = vsub.f32 %v696, %v697
        %v699 = vand.u32 %v698, 4294901760
        %700 = vmatpush1.msra.mxu0 %v699
        %701 = vmatprep.subr.mxu0 0.0
        %v702 = vand.u32 %v355, 4294901760
        %v703 = vsub.f32 %v355, %v702
        %v704 = vand.u32 %v703, 4294901760
        %v705 = vsub.f32 %v703, %v704
        %v706 = vand.u32 %v705, 4294901760
        %707 = vmatpush1.msra.mxu0 %v706
        %708 = vmatprep.subr.mxu0 0.0
        %v709 = vand.u32 %v356, 4294901760
        %v710 = vsub.f32 %v356, %v709
        %v711 = vand.u32 %v710, 4294901760
        %v712 = vsub.f32 %v710, %v711
        %v713 = vand.u32 %v712, 4294901760
        %714 = vmatpush1.msra.mxu0 %v713
        %v715 = vand.u32 %v322, 4294901760
        %716 = vmatprep.mubr.f32.mxu0 %v715
        %v717 = vand.u32 %v321, 4294901760
        %718 = vmatmul.mubr.f32.gmra.mrb[0].mxu0 %v717
        %v719 = vpop.f32.mrb[0].mxu0
        %v720 = vadd.f32 %v473, %v719
        %v721 = vpop.f32.mrb[0].mxu0
        %v722 = vand.u32 %v324, 4294901760
        %723 = vmatprep.mubr.f32.mxu0 %v722
        %v724 = vand.u32 %v323, 4294901760
        %725 = vmatmul.mubr.f32.gmra.mrb[0].mxu0 %v724
        %v726 = vpop.f32.mrb[0].mxu0
        %v727 = vadd.f32 %v488, %v726
        %v728 = vpop.f32.mrb[0].mxu0
        %729 = vdwg.mxu0
        %730 = vmatprep.subr.mxu0 0.0
        %v731 = vand.u32 %v325, 4294901760
        %v732 = vsub.f32 %v325, %v731
        %733 = vmatpush1.msra.mxu0 %v732
        %734 = vmatprep.subr.mxu0 0.0
        %v735 = vand.u32 %v326, 4294901760
        %v736 = vsub.f32 %v326, %v735
        %737 = vmatpush1.msra.mxu0 %v736
        %738 = vmatprep.subr.mxu0 0.0
        %v739 = vand.u32 %v327, 4294901760
        %v740 = vsub.f32 %v327, %v739
        %741 = vmatpush1.msra.mxu0 %v740
        %742 = vmatprep.subr.mxu0 0.0
        %v743 = vand.u32 %v328, 4294901760
        %v744 = vsub.f32 %v328, %v743
        %745 = vmatpush1.msra.mxu0 %v744
        %746 = vmatprep.subr.mxu0 0.0
        %v747 = vand.u32 %v329, 4294901760
        %v748 = vsub.f32 %v329, %v747
        %749 = vmatpush1.msra.mxu0 %v748
        %750 = vmatprep.subr.mxu0 0.0
        %v751 = vand.u32 %v330, 4294901760
        %v752 = vsub.f32 %v330, %v751
        %753 = vmatpush1.msra.mxu0 %v752
        %754 = vmatprep.subr.mxu0 0.0
        %v755 = vand.u32 %v331, 4294901760
        %v756 = vsub.f32 %v331, %v755
        %757 = vmatpush1.msra.mxu0 %v756
        %758 = vmatprep.subr.mxu0 0.0
        %v759 = vand.u32 %v332, 4294901760
        %v760 = vsub.f32 %v332, %v759
        %761 = vmatpush1.msra.mxu0 %v760
        %762 = vmatprep.subr.mxu0 0.0
        %v763 = vand.u32 %v333, 4294901760
        %v764 = vsub.f32 %v333, %v763
        %765 = vmatpush1.msra.mxu0 %v764
        %766 = vmatprep.subr.mxu0 0.0
        %v767 = vand.u32 %v334, 4294901760
        %v768 = vsub.f32 %v334, %v767
        %769 = vmatpush1.msra.mxu0 %v768
        %770 = vmatprep.subr.mxu0 0.0
        %v771 = vand.u32 %v335, 4294901760
        %v772 = vsub.f32 %v335, %v771
        %773 = vmatpush1.msra.mxu0 %v772
        %774 = vmatprep.subr.mxu0 0.0
        %v775 = vand.u32 %v336, 4294901760
        %v776 = vsub.f32 %v336, %v775
        %777 = vmatpush1.msra.mxu0 %v776
        %778 = vmatprep.subr.mxu0 0.0
        %v779 = vand.u32 %v337, 4294901760
        %v780 = vsub.f32 %v337, %v779
        %781 = vmatpush1.msra.mxu0 %v780
        %782 = vmatprep.subr.mxu0 0.0
        %v783 = vand.u32 %v338, 4294901760
        %v784 = vsub.f32 %v338, %v783
        %785 = vmatpush1.msra.mxu0 %v784
        %786 = vmatprep.subr.mxu0 0.0
        %v787 = vand.u32 %v339, 4294901760
        %v788 = vsub.f32 %v339, %v787
        %789 = vmatpush1.msra.mxu0 %v788
        %790 = vmatprep.subr.mxu0 0.0
        %v791 = vand.u32 %v340, 4294901760
        %v792 = vsub.f32 %v340, %v791
        %793 = vmatpush1.msra.mxu0 %v792
        %794 = vmatprep.subr.mxu0 0.0
        %v795 = vand.u32 %v341, 4294901760
        %v796 = vsub.f32 %v341, %v795
        %797 = vmatpush1.msra.mxu0 %v796
        %798 = vmatprep.subr.mxu0 0.0
        %v799 = vand.u32 %v342, 4294901760
        %v800 = vsub.f32 %v342, %v799
        %801 = vmatpush1.msra.mxu0 %v800
        %802 = vmatprep.subr.mxu0 0.0
        %v803 = vand.u32 %v343, 4294901760
        %v804 = vsub.f32 %v343, %v803
        %805 = vmatpush1.msra.mxu0 %v804
        %806 = vmatprep.subr.mxu0 0.0
        %v807 = vand.u32 %v344, 4294901760
        %v808 = vsub.f32 %v344, %v807
        %809 = vmatpush1.msra.mxu0 %v808
        %810 = vmatprep.subr.mxu0 0.0
        %v811 = vand.u32 %v345, 4294901760
        %v812 = vsub.f32 %v345, %v811
        %813 = vmatpush1.msra.mxu0 %v812
        %814 = vmatprep.subr.mxu0 0.0
        %v815 = vand.u32 %v346, 4294901760
        %v816 = vsub.f32 %v346, %v815
        %817 = vmatpush1.msra.mxu0 %v816
        %818 = vmatprep.subr.mxu0 0.0
        %v819 = vand.u32 %v347, 4294901760
        %v820 = vsub.f32 %v347, %v819
        %821 = vmatpush1.msra.mxu0 %v820
        %822 = vmatprep.subr.mxu0 0.0
        %v823 = vand.u32 %v348, 4294901760
        %v824 = vsub.f32 %v348, %v823
        %825 = vmatpush1.msra.mxu0 %v824
        %826 = vmatprep.subr.mxu0 0.0
        %v827 = vand.u32 %v349, 4294901760
        %v828 = vsub.f32 %v349, %v827
        %829 = vmatpush1.msra.mxu0 %v828
        %830 = vmatprep.subr.mxu0 0.0
        %v831 = vand.u32 %v350, 4294901760
        %v832 = vsub.f32 %v350, %v831
        %833 = vmatpush1.msra.mxu0 %v832
        %834 = vmatprep.subr.mxu0 0.0
        %v835 = vand.u32 %v351, 4294901760
        %v836 = vsub.f32 %v351, %v835
        %837 = vmatpush1.msra.mxu0 %v836
        %838 = vmatprep.subr.mxu0 0.0
        %v839 = vand.u32 %v352, 4294901760
        %v840 = vsub.f32 %v352, %v839
        %841 = vmatpush1.msra.mxu0 %v840
        %842 = vmatprep.subr.mxu0 0.0
        %v843 = vand.u32 %v353, 4294901760
        %v844 = vsub.f32 %v353, %v843
        %845 = vmatpush1.msra.mxu0 %v844
        %846 = vmatprep.subr.mxu0 0.0
        %v847 = vand.u32 %v354, 4294901760
        %v848 = vsub.f32 %v354, %v847
        %849 = vmatpush1.msra.mxu0 %v848
        %850 = vmatprep.subr.mxu0 0.0
        %v851 = vand.u32 %v355, 4294901760
        %v852 = vsub.f32 %v355, %v851
        %853 = vmatpush1.msra.mxu0 %v852
        %854 = vmatprep.subr.mxu0 0.0
        %v855 = vand.u32 %v356, 4294901760
        %v856 = vsub.f32 %v356, %v855
        %857 = vmatpush1.msra.mxu0 %v856
        %v858 = vand.u32 %v322, 4294901760
        %v859 = vsub.f32 %v322, %v858
        %860 = vmatprep.mubr.f32.mxu0 %v859
        %v861 = vand.u32 %v321, 4294901760
        %v862 = vsub.f32 %v321, %v861
        %863 = vmatmul.mubr.f32.gmra.mrb[0].mxu0 %v862
        %v864 = vpop.f32.mrb[0].mxu0
        %v865 = vadd.f32 %v720, %v864
        %v866 = vpop.f32.mrb[0].mxu0
        %v867 = vand.u32 %v324, 4294901760
        %v868 = vsub.f32 %v324, %v867
        %869 = vmatprep.mubr.f32.mxu0 %v868
        %v870 = vand.u32 %v323, 4294901760
        %v871 = vsub.f32 %v323, %v870
        %872 = vmatmul.mubr.f32.gmra.mrb[0].mxu0 %v871
        %v873 = vpop.f32.mrb[0].mxu0
        %v874 = vadd.f32 %v727, %v873
        %v875 = vpop.f32.mrb[0].mxu0
        %876 = vdwg.mxu0
        %877 = vmatprep.subr.mxu0 0.0
        %v878 = vand.u32 %v325, 4294901760
        %879 = vmatpush1.msra.mxu0 %v878
        %880 = vmatprep.subr.mxu0 0.0
        %v881 = vand.u32 %v326, 4294901760
        %882 = vmatpush1.msra.mxu0 %v881
        %883 = vmatprep.subr.mxu0 0.0
        %v884 = vand.u32 %v327, 4294901760
        %885 = vmatpush1.msra.mxu0 %v884
        %886 = vmatprep.subr.mxu0 0.0
        %v887 = vand.u32 %v328, 4294901760
        %888 = vmatpush1.msra.mxu0 %v887
        %889 = vmatprep.subr.mxu0 0.0
        %v890 = vand.u32 %v329, 4294901760
        %891 = vmatpush1.msra.mxu0 %v890
        %892 = vmatprep.subr.mxu0 0.0
        %v893 = vand.u32 %v330, 4294901760
        %894 = vmatpush1.msra.mxu0 %v893
        %895 = vmatprep.subr.mxu0 0.0
        %v896 = vand.u32 %v331, 4294901760
        %897 = vmatpush1.msra.mxu0 %v896
        %898 = vmatprep.subr.mxu0 0.0
        %v899 = vand.u32 %v332, 4294901760
        %900 = vmatpush1.msra.mxu0 %v899
        %901 = vmatprep.subr.mxu0 0.0
        %v902 = vand.u32 %v333, 4294901760
        %903 = vmatpush1.msra.mxu0 %v902
        %904 = vmatprep.subr.mxu0 0.0
        %v905 = vand.u32 %v334, 4294901760
        %906 = vmatpush1.msra.mxu0 %v905
        %907 = vmatprep.subr.mxu0 0.0
        %v908 = vand.u32 %v335, 4294901760
        %909 = vmatpush1.msra.mxu0 %v908
        %910 = vmatprep.subr.mxu0 0.0
        %v911 = vand.u32 %v336, 4294901760
        %912 = vmatpush1.msra.mxu0 %v911
        %913 = vmatprep.subr.mxu0 0.0
        %v914 = vand.u32 %v337, 4294901760
        %915 = vmatpush1.msra.mxu0 %v914
        %916 = vmatprep.subr.mxu0 0.0
        %v917 = vand.u32 %v338, 4294901760
        %918 = vmatpush1.msra.mxu0 %v917
        %919 = vmatprep.subr.mxu0 0.0
        %v920 = vand.u32 %v339, 4294901760
        %921 = vmatpush1.msra.mxu0 %v920
        %922 = vmatprep.subr.mxu0 0.0
        %v923 = vand.u32 %v340, 4294901760
        %924 = vmatpush1.msra.mxu0 %v923
        %925 = vmatprep.subr.mxu0 0.0
        %v926 = vand.u32 %v341, 4294901760
        %927 = vmatpush1.msra.mxu0 %v926
        %928 = vmatprep.subr.mxu0 0.0
        %v929 = vand.u32 %v342, 4294901760
        %930 = vmatpush1.msra.mxu0 %v929
        %931 = vmatprep.subr.mxu0 0.0
        %v932 = vand.u32 %v343, 4294901760
        %933 = vmatpush1.msra.mxu0 %v932
        %934 = vmatprep.subr.mxu0 0.0
        %v935 = vand.u32 %v344, 4294901760
        %936 = vmatpush1.msra.mxu0 %v935
        %937 = vmatprep.subr.mxu0 0.0
        %v938 = vand.u32 %v345, 4294901760
        %939 = vmatpush1.msra.mxu0 %v938
        %940 = vmatprep.subr.mxu0 0.0
        %v941 = vand.u32 %v346, 4294901760
        %942 = vmatpush1.msra.mxu0 %v941
        %943 = vmatprep.subr.mxu0 0.0
        %v944 = vand.u32 %v347, 4294901760
        %945 = vmatpush1.msra.mxu0 %v944
        %946 = vmatprep.subr.mxu0 0.0
        %v947 = vand.u32 %v348, 4294901760
        %948 = vmatpush1.msra.mxu0 %v947
        %949 = vmatprep.subr.mxu0 0.0
        %v950 = vand.u32 %v349, 4294901760
        %951 = vmatpush1.msra.mxu0 %v950
        %952 = vmatprep.subr.mxu0 0.0
        %v953 = vand.u32 %v350, 4294901760
        %954 = vmatpush1.msra.mxu0 %v953
        %955 = vmatprep.subr.mxu0 0.0
        %v956 = vand.u32 %v351, 4294901760
        %957 = vmatpush1.msra.mxu0 %v956
        %958 = vmatprep.subr.mxu0 0.0
        %v959 = vand.u32 %v352, 4294901760
        %960 = vmatpush1.msra.mxu0 %v959
        %961 = vmatprep.subr.mxu0 0.0
        %v962 = vand.u32 %v353, 4294901760
        %963 = vmatpush1.msra.mxu0 %v962
        %964 = vmatprep.subr.mxu0 0.0
        %v965 = vand.u32 %v354, 4294901760
        %966 = vmatpush1.msra.mxu0 %v965
        %967 = vmatprep.subr.mxu0 0.0
        %v968 = vand.u32 %v355, 4294901760
        %969 = vmatpush1.msra.mxu0 %v968
        %970 = vmatprep.subr.mxu0 0.0
        %v971 = vand.u32 %v356, 4294901760
        %972 = vmatpush1.msra.mxu0 %v971
        %v973 = vand.u32 %v322, 4294901760
        %v974 = vsub.f32 %v322, %v973
        %v975 = vand.u32 %v974, 4294901760
        %976 = vmatprep.mubr.f32.mxu0 %v975
        %v977 = vand.u32 %v321, 4294901760
        %v978 = vsub.f32 %v321, %v977
        %v979 = vand.u32 %v978, 4294901760
        %980 = vmatmul.mubr.f32.gmra.mrb[0].mxu0 %v979
        %v981 = vpop.f32.mrb[0].mxu0
        %v982 = vadd.f32 %v865, %v981
        %v983 = vpop.f32.mrb[0].mxu0
        %v984 = vand.u32 %v324, 4294901760
        %v985 = vsub.f32 %v324, %v984
        %v986 = vand.u32 %v985, 4294901760
        %987 = vmatprep.mubr.f32.mxu0 %v986
        %v988 = vand.u32 %v323, 4294901760
        %v989 = vsub.f32 %v323, %v988
        %v990 = vand.u32 %v989, 4294901760
        %991 = vmatmul.mubr.f32.gmra.mrb[0].mxu0 %v990
        %v992 = vpop.f32.mrb[0].mxu0
        %v993 = vadd.f32 %v874, %v992
        %v994 = vpop.f32.mrb[0].mxu0
        %995 = vdwg.mxu0
        %996 = vmatprep.subr.mxu0 0.0
        %v997 = vand.u32 %v325, 4294901760
        %v998 = vsub.f32 %v325, %v997
        %v999 = vand.u32 %v998, 4294901760
        %1000 = vmatpush1.msra.mxu0 %v999
        %1001 = vmatprep.subr.mxu0 0.0
        %v1002 = vand.u32 %v326, 4294901760
        %v1003 = vsub.f32 %v326, %v1002
        %v1004 = vand.u32 %v1003, 4294901760
        %1005 = vmatpush1.msra.mxu0 %v1004
        %1006 = vmatprep.subr.mxu0 0.0
        %v1007 = vand.u32 %v327, 4294901760
        %v1008 = vsub.f32 %v327, %v1007
        %v1009 = vand.u32 %v1008, 4294901760
        %1010 = vmatpush1.msra.mxu0 %v1009
        %1011 = vmatprep.subr.mxu0 0.0
        %v1012 = vand.u32 %v328, 4294901760
        %v1013 = vsub.f32 %v328, %v1012
        %v1014 = vand.u32 %v1013, 4294901760
        %1015 = vmatpush1.msra.mxu0 %v1014
        %1016 = vmatprep.subr.mxu0 0.0
        %v1017 = vand.u32 %v329, 4294901760
        %v1018 = vsub.f32 %v329, %v1017
        %v1019 = vand.u32 %v1018, 4294901760
        %1020 = vmatpush1.msra.mxu0 %v1019
        %1021 = vmatprep.subr.mxu0 0.0
        %v1022 = vand.u32 %v330, 4294901760
        %v1023 = vsub.f32 %v330, %v1022
        %v1024 = vand.u32 %v1023, 4294901760
        %1025 = vmatpush1.msra.mxu0 %v1024
        %1026 = vmatprep.subr.mxu0 0.0
        %v1027 = vand.u32 %v331, 4294901760
        %v1028 = vsub.f32 %v331, %v1027
        %v1029 = vand.u32 %v1028, 4294901760
        %1030 = vmatpush1.msra.mxu0 %v1029
        %1031 = vmatprep.subr.mxu0 0.0
        %v1032 = vand.u32 %v332, 4294901760
        %v1033 = vsub.f32 %v332, %v1032
        %v1034 = vand.u32 %v1033, 4294901760
        %1035 = vmatpush1.msra.mxu0 %v1034
        %1036 = vmatprep.subr.mxu0 0.0
        %v1037 = vand.u32 %v333, 4294901760
        %v1038 = vsub.f32 %v333, %v1037
        %v1039 = vand.u32 %v1038, 4294901760
        %1040 = vmatpush1.msra.mxu0 %v1039
        %1041 = vmatprep.subr.mxu0 0.0
        %v1042 = vand.u32 %v334, 4294901760
        %v1043 = vsub.f32 %v334, %v1042
        %v1044 = vand.u32 %v1043, 4294901760
        %1045 = vmatpush1.msra.mxu0 %v1044
        %1046 = vmatprep.subr.mxu0 0.0
        %v1047 = vand.u32 %v335, 4294901760
        %v1048 = vsub.f32 %v335, %v1047
        %v1049 = vand.u32 %v1048, 4294901760
        %1050 = vmatpush1.msra.mxu0 %v1049
        %1051 = vmatprep.subr.mxu0 0.0
        %v1052 = vand.u32 %v336, 4294901760
        %v1053 = vsub.f32 %v336, %v1052
        %v1054 = vand.u32 %v1053, 4294901760
        %1055 = vmatpush1.msra.mxu0 %v1054
        %1056 = vmatprep.subr.mxu0 0.0
        %v1057 = vand.u32 %v337, 4294901760
        %v1058 = vsub.f32 %v337, %v1057
        %v1059 = vand.u32 %v1058, 4294901760
        %1060 = vmatpush1.msra.mxu0 %v1059
        %1061 = vmatprep.subr.mxu0 0.0
        %v1062 = vand.u32 %v338, 4294901760
        %v1063 = vsub.f32 %v338, %v1062
        %v1064 = vand.u32 %v1063, 4294901760
        %1065 = vmatpush1.msra.mxu0 %v1064
        %1066 = vmatprep.subr.mxu0 0.0
        %v1067 = vand.u32 %v339, 4294901760
        %v1068 = vsub.f32 %v339, %v1067
        %v1069 = vand.u32 %v1068, 4294901760
        %1070 = vmatpush1.msra.mxu0 %v1069
        %1071 = vmatprep.subr.mxu0 0.0
        %v1072 = vand.u32 %v340, 4294901760
        %v1073 = vsub.f32 %v340, %v1072
        %v1074 = vand.u32 %v1073, 4294901760
        %1075 = vmatpush1.msra.mxu0 %v1074
        %1076 = vmatprep.subr.mxu0 0.0
        %v1077 = vand.u32 %v341, 4294901760
        %v1078 = vsub.f32 %v341, %v1077
        %v1079 = vand.u32 %v1078, 4294901760
        %1080 = vmatpush1.msra.mxu0 %v1079
        %1081 = vmatprep.subr.mxu0 0.0
        %v1082 = vand.u32 %v342, 4294901760
        %v1083 = vsub.f32 %v342, %v1082
        %v1084 = vand.u32 %v1083, 4294901760
        %1085 = vmatpush1.msra.mxu0 %v1084
        %1086 = vmatprep.subr.mxu0 0.0
        %v1087 = vand.u32 %v343, 4294901760
        %v1088 = vsub.f32 %v343, %v1087
        %v1089 = vand.u32 %v1088, 4294901760
        %1090 = vmatpush1.msra.mxu0 %v1089
        %1091 = vmatprep.subr.mxu0 0.0
        %v1092 = vand.u32 %v344, 4294901760
        %v1093 = vsub.f32 %v344, %v1092
        %v1094 = vand.u32 %v1093, 4294901760
        %1095 = vmatpush1.msra.mxu0 %v1094
        %1096 = vmatprep.subr.mxu0 0.0
        %v1097 = vand.u32 %v345, 4294901760
        %v1098 = vsub.f32 %v345, %v1097
        %v1099 = vand.u32 %v1098, 4294901760
        %1100 = vmatpush1.msra.mxu0 %v1099
        %1101 = vmatprep.subr.mxu0 0.0
        %v1102 = vand.u32 %v346, 4294901760
        %v1103 = vsub.f32 %v346, %v1102
        %v1104 = vand.u32 %v1103, 4294901760
        %1105 = vmatpush1.msra.mxu0 %v1104
        %1106 = vmatprep.subr.mxu0 0.0
        %v1107 = vand.u32 %v347, 4294901760
        %v1108 = vsub.f32 %v347, %v1107
        %v1109 = vand.u32 %v1108, 4294901760
        %1110 = vmatpush1.msra.mxu0 %v1109
        %1111 = vmatprep.subr.mxu0 0.0
        %v1112 = vand.u32 %v348, 4294901760
        %v1113 = vsub.f32 %v348, %v1112
        %v1114 = vand.u32 %v1113, 4294901760
        %1115 = vmatpush1.msra.mxu0 %v1114
        %1116 = vmatprep.subr.mxu0 0.0
        %v1117 = vand.u32 %v349, 4294901760
        %v1118 = vsub.f32 %v349, %v1117
        %v1119 = vand.u32 %v1118, 4294901760
        %1120 = vmatpush1.msra.mxu0 %v1119
        %1121 = vmatprep.subr.mxu0 0.0
        %v1122 = vand.u32 %v350, 4294901760
        %v1123 = vsub.f32 %v350, %v1122
        %v1124 = vand.u32 %v1123, 4294901760
        %1125 = vmatpush1.msra.mxu0 %v1124
        %1126 = vmatprep.subr.mxu0 0.0
        %v1127 = vand.u32 %v351, 4294901760
        %v1128 = vsub.f32 %v351, %v1127
        %v1129 = vand.u32 %v1128, 4294901760
        %1130 = vmatpush1.msra.mxu0 %v1129
        %1131 = vmatprep.subr.mxu0 0.0
        %v1132 = vand.u32 %v352, 4294901760
        %v1133 = vsub.f32 %v352, %v1132
        %v1134 = vand.u32 %v1133, 4294901760
        %1135 = vmatpush1.msra.mxu0 %v1134
        %1136 = vmatprep.subr.mxu0 0.0
        %v1137 = vand.u32 %v353, 4294901760
        %v1138 = vsub.f32 %v353, %v1137
        %v1139 = vand.u32 %v1138, 4294901760
        %1140 = vmatpush1.msra.mxu0 %v1139
        %1141 = vmatprep.subr.mxu0 0.0
        %v1142 = vand.u32 %v354, 4294901760
        %v1143 = vsub.f32 %v354, %v1142
        %v1144 = vand.u32 %v1143, 4294901760
        %1145 = vmatpush1.msra.mxu0 %v1144
        %1146 = vmatprep.subr.mxu0 0.0
        %v1147 = vand.u32 %v355, 4294901760
        %v1148 = vsub.f32 %v355, %v1147
        %v1149 = vand.u32 %v1148, 4294901760
        %1150 = vmatpush1.msra.mxu0 %v1149
        %1151 = vmatprep.subr.mxu0 0.0
        %v1152 = vand.u32 %v356, 4294901760
        %v1153 = vsub.f32 %v356, %v1152
        %v1154 = vand.u32 %v1153, 4294901760
        %1155 = vmatpush1.msra.mxu0 %v1154
        %v1156 = vand.u32 %v322, 4294901760
        %1157 = vmatprep.mubr.f32.mxu0 %v1156
        %v1158 = vand.u32 %v321, 4294901760
        %1159 = vmatmul.mubr.f32.gmra.mrb[0].mxu0 %v1158
        %v1160 = vpop.f32.mrb[0].mxu0
        %v1161 = vadd.f32 %v982, %v1160
        %v1162 = vpop.f32.mrb[0].mxu0
        %v1163 = vand.u32 %v324, 4294901760
        %1164 = vmatprep.mubr.f32.mxu0 %v1163
        %v1165 = vand.u32 %v323, 4294901760
        %1166 = vmatmul.mubr.f32.gmra.mrb[0].mxu0 %v1165
        %v1167 = vpop.f32.mrb[0].mxu0
        %v1168 = vadd.f32 %v993, %v1167
        %v1169 = vpop.f32.mrb[0].mxu0
        %1170 = vdwg.mxu0
        %1171 = vmatprep.subr.mxu0 0.0
        %v1172 = vand.u32 %v325, 4294901760
        %1173 = vmatpush1.msra.mxu0 %v1172
        %1174 = vmatprep.subr.mxu0 0.0
        %v1175 = vand.u32 %v326, 4294901760
        %1176 = vmatpush1.msra.mxu0 %v1175
        %1177 = vmatprep.subr.mxu0 0.0
        %v1178 = vand.u32 %v327, 4294901760
        %1179 = vmatpush1.msra.mxu0 %v1178
        %1180 = vmatprep.subr.mxu0 0.0
        %v1181 = vand.u32 %v328, 4294901760
        %1182 = vmatpush1.msra.mxu0 %v1181
        %1183 = vmatprep.subr.mxu0 0.0
        %v1184 = vand.u32 %v329, 4294901760
        %1185 = vmatpush1.msra.mxu0 %v1184
        %1186 = vmatprep.subr.mxu0 0.0
        %v1187 = vand.u32 %v330, 4294901760
        %1188 = vmatpush1.msra.mxu0 %v1187
        %1189 = vmatprep.subr.mxu0 0.0
        %v1190 = vand.u32 %v331, 4294901760
        %1191 = vmatpush1.msra.mxu0 %v1190
        %1192 = vmatprep.subr.mxu0 0.0
        %v1193 = vand.u32 %v332, 4294901760
        %1194 = vmatpush1.msra.mxu0 %v1193
        %1195 = vmatprep.subr.mxu0 0.0
        %v1196 = vand.u32 %v333, 4294901760
        %1197 = vmatpush1.msra.mxu0 %v1196
        %1198 = vmatprep.subr.mxu0 0.0
        %v1199 = vand.u32 %v334, 4294901760
        %1200 = vmatpush1.msra.mxu0 %v1199
        %1201 = vmatprep.subr.mxu0 0.0
        %v1202 = vand.u32 %v335, 4294901760
        %1203 = vmatpush1.msra.mxu0 %v1202
        %1204 = vmatprep.subr.mxu0 0.0
        %v1205 = vand.u32 %v336, 4294901760
        %1206 = vmatpush1.msra.mxu0 %v1205
        %1207 = vmatprep.subr.mxu0 0.0
        %v1208 = vand.u32 %v337, 4294901760
        %1209 = vmatpush1.msra.mxu0 %v1208
        %1210 = vmatprep.subr.mxu0 0.0
        %v1211 = vand.u32 %v338, 4294901760
        %1212 = vmatpush1.msra.mxu0 %v1211
        %1213 = vmatprep.subr.mxu0 0.0
        %v1214 = vand.u32 %v339, 4294901760
        %1215 = vmatpush1.msra.mxu0 %v1214
        %1216 = vmatprep.subr.mxu0 0.0
        %v1217 = vand.u32 %v340, 4294901760
        %1218 = vmatpush1.msra.mxu0 %v1217
        %1219 = vmatprep.subr.mxu0 0.0
        %v1220 = vand.u32 %v341, 4294901760
        %1221 = vmatpush1.msra.mxu0 %v1220
        %1222 = vmatprep.subr.mxu0 0.0
        %v1223 = vand.u32 %v342, 4294901760
        %1224 = vmatpush1.msra.mxu0 %v1223
        %1225 = vmatprep.subr.mxu0 0.0
        %v1226 = vand.u32 %v343, 4294901760
        %1227 = vmatpush1.msra.mxu0 %v1226
        %1228 = vmatprep.subr.mxu0 0.0
        %v1229 = vand.u32 %v344, 4294901760
        %1230 = vmatpush1.msra.mxu0 %v1229
        %1231 = vmatprep.subr.mxu0 0.0
        %v1232 = vand.u32 %v345, 4294901760
        %1233 = vmatpush1.msra.mxu0 %v1232
        %1234 = vmatprep.subr.mxu0 0.0
        %v1235 = vand.u32 %v346, 4294901760
        %1236 = vmatpush1.msra.mxu0 %v1235
        %1237 = vmatprep.subr.mxu0 0.0
        %v1238 = vand.u32 %v347, 4294901760
        %1239 = vmatpush1.msra.mxu0 %v1238
        %1240 = vmatprep.subr.mxu0 0.0
        %v1241 = vand.u32 %v348, 4294901760
        %1242 = vmatpush1.msra.mxu0 %v1241
        %1243 = vmatprep.subr.mxu0 0.0
        %v1244 = vand.u32 %v349, 4294901760
        %1245 = vmatpush1.msra.mxu0 %v1244
        %1246 = vmatprep.subr.mxu0 0.0
        %v1247 = vand.u32 %v350, 4294901760
        %1248 = vmatpush1.msra.mxu0 %v1247
        %1249 = vmatprep.subr.mxu0 0.0
        %v1250 = vand.u32 %v351, 4294901760
        %1251 = vmatpush1.msra.mxu0 %v1250
        %1252 = vmatprep.subr.mxu0 0.0
        %v1253 = vand.u32 %v352, 4294901760
        %1254 = vmatpush1.msra.mxu0 %v1253
        %1255 = vmatprep.subr.mxu0 0.0
        %v1256 = vand.u32 %v353, 4294901760
        %1257 = vmatpush1.msra.mxu0 %v1256
        %1258 = vmatprep.subr.mxu0 0.0
        %v1259 = vand.u32 %v354, 4294901760
        %1260 = vmatpush1.msra.mxu0 %v1259
        %1261 = vmatprep.subr.mxu0 0.0
        %v1262 = vand.u32 %v355, 4294901760
        %1263 = vmatpush1.msra.mxu0 %v1262
        %1264 = vmatprep.subr.mxu0 0.0
        %v1265 = vand.u32 %v356, 4294901760
        %1266 = vmatpush1.msra.mxu0 %v1265
        %v1267 = vand.u32 %v322, 4294901760
        %1268 = vmatprep.mubr.f32.mxu0 %v1267
        %v1269 = vand.u32 %v321, 4294901760
        %1270 = vmatmul.mubr.f32.gmra.mrb[0].mxu0 %v1269
        %v1271 = vpop.f32.mrb[0].mxu0
        %v1272 = vadd.f32 %v1161, %v1271
        %v1273 = vpop.f32.mrb[0].mxu0
        %v1274 = vand.u32 %v324, 4294901760
        %1275 = vmatprep.mubr.f32.mxu0 %v1274
        %v1276 = vand.u32 %v323, 4294901760
        %1277 = vmatmul.mubr.f32.gmra.mrb[0].mxu0 %v1276
        %v1278 = vpop.f32.mrb[0].mxu0
        %v1279 = vadd.f32 %v1168, %v1278
        %v1280 = vpop.f32.mrb[0].mxu0
        %1281 = vdwg.mxu0
        %v1282 = vmax.f32 %v1272, 0.0
        %v1283 = vmax.f32 %v1279, 0.0
        %v1284 = vld [vmem:[#allocation2] sm:$0xff]
        %v1285 = vld [vmem:[#allocation2 + $0x8] sm:$0xff]
        %v1286 = vld [vmem:[#allocation2 + $0x10] sm:$0xff]
        %v1287 = vld [vmem:[#allocation2 + $0x18] sm:$0xff]
        %v1288 = vld [vmem:[%s277] sm:$0xff]
        %v1289 = vld [vmem:[%s277 + $0x8] sm:$0xff]
        %v1290 = vld [vmem:[%s277 + $0x10] sm:$0xff]
        %v1291 = vld [vmem:[%s277 + $0x18] sm:$0xff]
        %v1292 = vld [vmem:[%s277 + $0x20] sm:$0xff]
        %v1293 = vld [vmem:[%s277 + $0x28] sm:$0xff]
        %v1294 = vld [vmem:[%s277 + $0x30] sm:$0xff]
        %v1295 = vld [vmem:[%s277 + $0x38] sm:$0xff]
        %v1296 = vld [vmem:[%s277 + $0x40] sm:$0xff]
        %v1297 = vld [vmem:[%s277 + $0x48] sm:$0xff]
        %v1298 = vld [vmem:[%s277 + $0x50] sm:$0xff]
        %v1299 = vld [vmem:[%s277 + $0x58] sm:$0xff]
        %v1300 = vld [vmem:[%s277 + $0x60] sm:$0xff]
        %v1301 = vld [vmem:[%s277 + $0x68] sm:$0xff]
        %v1302 = vld [vmem:[%s277 + $0x70] sm:$0xff]
        %v1303 = vld [vmem:[%s277 + $0x78] sm:$0xff]
        %v1304 = vld [vmem:[%s277 + $0x80] sm:$0xff]
        %v1305 = vld [vmem:[%s277 + $0x88] sm:$0xff]
        %v1306 = vld [vmem:[%s277 + $0x90] sm:$0xff]
        %v1307 = vld [vmem:[%s277 + $0x98] sm:$0xff]
        %v1308 = vld [vmem:[%s277 + $0xa0] sm:$0xff]
        %v1309 = vld [vmem:[%s277 + $0xa8] sm:$0xff]
        %v1310 = vld [vmem:[%s277 + $0xb0] sm:$0xff]
        %v1311 = vld [vmem:[%s277 + $0xb8] sm:$0xff]
        %v1312 = vld [vmem:[%s277 + $0xc0] sm:$0xff]
        %v1313 = vld [vmem:[%s277 + $0xc8] sm:$0xff]
        %v1314 = vld [vmem:[%s277 + $0xd0] sm:$0xff]
        %v1315 = vld [vmem:[%s277 + $0xd8] sm:$0xff]
        %v1316 = vld [vmem:[%s277 + $0xe0] sm:$0xff]
        %v1317 = vld [vmem:[%s277 + $0xe8] sm:$0xff]
        %v1318 = vld [vmem:[%s277 + $0xf0] sm:$0xff]
        %v1319 = vld [vmem:[%s277 + $0xf8] sm:$0xff]
        %v1320 = vand.u32 %v1289, 4294901760
        %1321 = vmatprep.subr.mxu0 %v1320
        %v1322 = vand.u32 %v1288, 4294901760
        %1323 = vmatpush1.msra.mxu0 %v1322
        %v1324 = vand.u32 %v1291, 4294901760
        %1325 = vmatprep.subr.mxu0 %v1324
        %v1326 = vand.u32 %v1290, 4294901760
        %1327 = vmatpush1.msra.mxu0 %v1326
        %v1328 = vand.u32 %v1293, 4294901760
        %1329 = vmatprep.subr.mxu0 %v1328
        %v1330 = vand.u32 %v1292, 4294901760
        %1331 = vmatpush1.msra.mxu0 %v1330
        %v1332 = vand.u32 %v1295, 4294901760
        %1333 = vmatprep.subr.mxu0 %v1332
        %v1334 = vand.u32 %v1294, 4294901760
        %1335 = vmatpush1.msra.mxu0 %v1334
        %v1336 = vand.u32 %v1297, 4294901760
        %1337 = vmatprep.subr.mxu0 %v1336
        %v1338 = vand.u32 %v1296, 4294901760
        %1339 = vmatpush1.msra.mxu0 %v1338
        %v1340 = vand.u32 %v1299, 4294901760
        %1341 = vmatprep.subr.mxu0 %v1340
        %v1342 = vand.u32 %v1298, 4294901760
        %1343 = vmatpush1.msra.mxu0 %v1342
        %v1344 = vand.u32 %v1301, 4294901760
        %1345 = vmatprep.subr.mxu0 %v1344
        %v1346 = vand.u32 %v1300, 4294901760
        %1347 = vmatpush1.msra.mxu0 %v1346
        %v1348 = vand.u32 %v1303, 4294901760
        %1349 = vmatprep.subr.mxu0 %v1348
        %v1350 = vand.u32 %v1302, 4294901760
        %1351 = vmatpush1.msra.mxu0 %v1350
        %v1352 = vand.u32 %v1305, 4294901760
        %1353 = vmatprep.subr.mxu0 %v1352
        %v1354 = vand.u32 %v1304, 4294901760
        %1355 = vmatpush1.msra.mxu0 %v1354
        %v1356 = vand.u32 %v1307, 4294901760
        %1357 = vmatprep.subr.mxu0 %v1356
        %v1358 = vand.u32 %v1306, 4294901760
        %1359 = vmatpush1.msra.mxu0 %v1358
        %v1360 = vand.u32 %v1309, 4294901760
        %1361 = vmatprep.subr.mxu0 %v1360
        %v1362 = vand.u32 %v1308, 4294901760
        %1363 = vmatpush1.msra.mxu0 %v1362
        %v1364 = vand.u32 %v1311, 4294901760
        %1365 = vmatprep.subr.mxu0 %v1364
        %v1366 = vand.u32 %v1310, 4294901760
        %1367 = vmatpush1.msra.mxu0 %v1366
        %v1368 = vand.u32 %v1313, 4294901760
        %1369 = vmatprep.subr.mxu0 %v1368
        %v1370 = vand.u32 %v1312, 4294901760
        %1371 = vmatpush1.msra.mxu0 %v1370
        %v1372 = vand.u32 %v1315, 4294901760
        %1373 = vmatprep.subr.mxu0 %v1372
        %v1374 = vand.u32 %v1314, 4294901760
        %1375 = vmatpush1.msra.mxu0 %v1374
        %v1376 = vand.u32 %v1317, 4294901760
        %1377 = vmatprep.subr.mxu0 %v1376
        %v1378 = vand.u32 %v1316, 4294901760
        %1379 = vmatpush1.msra.mxu0 %v1378
        %v1380 = vand.u32 %v1319, 4294901760
        %1381 = vmatprep.subr.mxu0 %v1380
        %v1382 = vand.u32 %v1318, 4294901760
        %1383 = vmatpush1.msra.mxu0 %v1382
        %1384 = vmatprep.subr.mxu0 0.0
        %1385 = vmatpush1.msra.mxu0 0.0
        %1386 = vmatprep.subr.mxu0 0.0
        %1387 = vmatpush1.msra.mxu0 0.0
        %1388 = vmatprep.subr.mxu0 0.0
        %1389 = vmatpush1.msra.mxu0 0.0
        %1390 = vmatprep.subr.mxu0 0.0
        %1391 = vmatpush1.msra.mxu0 0.0
        %1392 = vmatprep.subr.mxu0 0.0
        %1393 = vmatpush1.msra.mxu0 0.0
        %1394 = vmatprep.subr.mxu0 0.0
        %1395 = vmatpush1.msra.mxu0 0.0
        %1396 = vmatprep.subr.mxu0 0.0
        %1397 = vmatpush1.msra.mxu0 0.0
        %1398 = vmatprep.subr.mxu0 0.0
        %1399 = vmatpush1.msra.mxu0 0.0
        %1400 = vmatprep.subr.mxu0 0.0
        %1401 = vmatpush1.msra.mxu0 0.0
        %1402 = vmatprep.subr.mxu0 0.0
        %1403 = vmatpush1.msra.mxu0 0.0
        %1404 = vmatprep.subr.mxu0 0.0
        %1405 = vmatpush1.msra.mxu0 0.0
        %1406 = vmatprep.subr.mxu0 0.0
        %1407 = vmatpush1.msra.mxu0 0.0
        %1408 = vmatprep.subr.mxu0 0.0
        %1409 = vmatpush1.msra.mxu0 0.0
        %1410 = vmatprep.subr.mxu0 0.0
        %1411 = vmatpush1.msra.mxu0 0.0
        %1412 = vmatprep.subr.mxu0 0.0
        %1413 = vmatpush1.msra.mxu0 0.0
        %1414 = vmatprep.subr.mxu0 0.0
        %1415 = vmatpush1.msra.mxu0 0.0
        %1416 = vmatprep.mubr.f32.mxu0 0.0
        %v1417 = vand.u32 %v1282, 4294901760
        %v1418 = vsub.f32 %v1282, %v1417
        %v1419 = vand.u32 %v1418, 4294901760
        %v1420 = vsub.f32 %v1418, %v1419
        %v1421 = vand.u32 %v1420, 4294901760
        %1422 = vmatmul.mubr.f32.gmra.mrb[0].mxu0 %v1421
        %v1423 = vpop.f32.mrb[0].mxu0
        %v1424 = vadd.f32 0.0, %v1423
        %v1425 = vpop.f32.mrb[0].mxu0
        %v1426 = vadd.f32 0.0, %v1425
        %1427 = vmatprep.mubr.f32.mxu0 0.0
        %v1428 = vand.u32 %v1283, 4294901760
        %v1429 = vsub.f32 %v1283, %v1428
        %v1430 = vand.u32 %v1429, 4294901760
        %v1431 = vsub.f32 %v1429, %v1430
        %v1432 = vand.u32 %v1431, 4294901760
        %1433 = vmatmul.mubr.f32.gmra.mrb[0].mxu0 %v1432
        %v1434 = vpop.f32.mrb[0].mxu0
        %v1435 = vadd.f32 0.0, %v1434
        %v1436 = vpop.f32.mrb[0].mxu0
        %v1437 = vadd.f32 0.0, %v1436
        %1438 = vdwg.mxu0
        %v1439 = vand.u32 %v1289, 4294901760
        %v1440 = vsub.f32 %v1289, %v1439
        %v1441 = vand.u32 %v1440, 4294901760
        %v1442 = vsub.f32 %v1440, %v1441
        %v1443 = vand.u32 %v1442, 4294901760
        %1444 = vmatprep.subr.mxu0 %v1443
        %v1445 = vand.u32 %v1288, 4294901760
        %v1446 = vsub.f32 %v1288, %v1445
        %v1447 = vand.u32 %v1446, 4294901760
        %v1448 = vsub.f32 %v1446, %v1447
        %v1449 = vand.u32 %v1448, 4294901760
        %1450 = vmatpush1.msra.mxu0 %v1449
        %v1451 = vand.u32 %v1291, 4294901760
        %v1452 = vsub.f32 %v1291, %v1451
        %v1453 = vand.u32 %v1452, 4294901760
        %v1454 = vsub.f32 %v1452, %v1453
        %v1455 = vand.u32 %v1454, 4294901760
        %1456 = vmatprep.subr.mxu0 %v1455
        %v1457 = vand.u32 %v1290, 4294901760
        %v1458 = vsub.f32 %v1290, %v1457
        %v1459 = vand.u32 %v1458, 4294901760
        %v1460 = vsub.f32 %v1458, %v1459
        %v1461 = vand.u32 %v1460, 4294901760
        %1462 = vmatpush1.msra.mxu0 %v1461
        %v1463 = vand.u32 %v1293, 4294901760
        %v1464 = vsub.f32 %v1293, %v1463
        %v1465 = vand.u32 %v1464, 4294901760
        %v1466 = vsub.f32 %v1464, %v1465
        %v1467 = vand.u32 %v1466, 4294901760
        %1468 = vmatprep.subr.mxu0 %v1467
        %v1469 = vand.u32 %v1292, 4294901760
        %v1470 = vsub.f32 %v1292, %v1469
        %v1471 = vand.u32 %v1470, 4294901760
        %v1472 = vsub.f32 %v1470, %v1471
        %v1473 = vand.u32 %v1472, 4294901760
        %1474 = vmatpush1.msra.mxu0 %v1473
        %v1475 = vand.u32 %v1295, 4294901760
        %v1476 = vsub.f32 %v1295, %v1475
        %v1477 = vand.u32 %v1476, 4294901760
        %v1478 = vsub.f32 %v1476, %v1477
        %v1479 = vand.u32 %v1478, 4294901760
        %1480 = vmatprep.subr.mxu0 %v1479
        %v1481 = vand.u32 %v1294, 4294901760
        %v1482 = vsub.f32 %v1294, %v1481
        %v1483 = vand.u32 %v1482, 4294901760
        %v1484 = vsub.f32 %v1482, %v1483
        %v1485 = vand.u32 %v1484, 4294901760
        %1486 = vmatpush1.msra.mxu0 %v1485
        %v1487 = vand.u32 %v1297, 4294901760
        %v1488 = vsub.f32 %v1297, %v1487
        %v1489 = vand.u32 %v1488, 4294901760
        %v1490 = vsub.f32 %v1488, %v1489
        %v1491 = vand.u32 %v1490, 4294901760
        %1492 = vmatprep.subr.mxu0 %v1491
        %v1493 = vand.u32 %v1296, 4294901760
        %v1494 = vsub.f32 %v1296, %v1493
        %v1495 = vand.u32 %v1494, 4294901760
        %v1496 = vsub.f32 %v1494, %v1495
        %v1497 = vand.u32 %v1496, 4294901760
        %1498 = vmatpush1.msra.mxu0 %v1497
        %v1499 = vand.u32 %v1299, 4294901760
        %v1500 = vsub.f32 %v1299, %v1499
        %v1501 = vand.u32 %v1500, 4294901760
        %v1502 = vsub.f32 %v1500, %v1501
        %v1503 = vand.u32 %v1502, 4294901760
        %1504 = vmatprep.subr.mxu0 %v1503
        %v1505 = vand.u32 %v1298, 4294901760
        %v1506 = vsub.f32 %v1298, %v1505
        %v1507 = vand.u32 %v1506, 4294901760
        %v1508 = vsub.f32 %v1506, %v1507
        %v1509 = vand.u32 %v1508, 4294901760
        %1510 = vmatpush1.msra.mxu0 %v1509
        %v1511 = vand.u32 %v1301, 4294901760
        %v1512 = vsub.f32 %v1301, %v1511
        %v1513 = vand.u32 %v1512, 4294901760
        %v1514 = vsub.f32 %v1512, %v1513
        %v1515 = vand.u32 %v1514, 4294901760
        %1516 = vmatprep.subr.mxu0 %v1515
        %v1517 = vand.u32 %v1300, 4294901760
        %v1518 = vsub.f32 %v1300, %v1517
        %v1519 = vand.u32 %v1518, 4294901760
        %v1520 = vsub.f32 %v1518, %v1519
        %v1521 = vand.u32 %v1520, 4294901760
        %1522 = vmatpush1.msra.mxu0 %v1521
        %v1523 = vand.u32 %v1303, 4294901760
        %v1524 = vsub.f32 %v1303, %v1523
        %v1525 = vand.u32 %v1524, 4294901760
        %v1526 = vsub.f32 %v1524, %v1525
        %v1527 = vand.u32 %v1526, 4294901760
        %1528 = vmatprep.subr.mxu0 %v1527
        %v1529 = vand.u32 %v1302, 4294901760
        %v1530 = vsub.f32 %v1302, %v1529
        %v1531 = vand.u32 %v1530, 4294901760
        %v1532 = vsub.f32 %v1530, %v1531
        %v1533 = vand.u32 %v1532, 4294901760
        %1534 = vmatpush1.msra.mxu0 %v1533
        %v1535 = vand.u32 %v1305, 4294901760
        %v1536 = vsub.f32 %v1305, %v1535
        %v1537 = vand.u32 %v1536, 4294901760
        %v1538 = vsub.f32 %v1536, %v1537
        %v1539 = vand.u32 %v1538, 4294901760
        %1540 = vmatprep.subr.mxu0 %v1539
        %v1541 = vand.u32 %v1304, 4294901760
        %v1542 = vsub.f32 %v1304, %v1541
        %v1543 = vand.u32 %v1542, 4294901760
        %v1544 = vsub.f32 %v1542, %v1543
        %v1545 = vand.u32 %v1544, 4294901760
        %1546 = vmatpush1.msra.mxu0 %v1545
        %v1547 = vand.u32 %v1307, 4294901760
        %v1548 = vsub.f32 %v1307, %v1547
        %v1549 = vand.u32 %v1548, 4294901760
        %v1550 = vsub.f32 %v1548, %v1549
        %v1551 = vand.u32 %v1550, 4294901760
        %1552 = vmatprep.subr.mxu0 %v1551
        %v1553 = vand.u32 %v1306, 4294901760
        %v1554 = vsub.f32 %v1306, %v1553
        %v1555 = vand.u32 %v1554, 4294901760
        %v1556 = vsub.f32 %v1554, %v1555
        %v1557 = vand.u32 %v1556, 4294901760
        %1558 = vmatpush1.msra.mxu0 %v1557
        %v1559 = vand.u32 %v1309, 4294901760
        %v1560 = vsub.f32 %v1309, %v1559
        %v1561 = vand.u32 %v1560, 4294901760
        %v1562 = vsub.f32 %v1560, %v1561
        %v1563 = vand.u32 %v1562, 4294901760
        %1564 = vmatprep.subr.mxu0 %v1563
        %v1565 = vand.u32 %v1308, 4294901760
        %v1566 = vsub.f32 %v1308, %v1565
        %v1567 = vand.u32 %v1566, 4294901760
        %v1568 = vsub.f32 %v1566, %v1567
        %v1569 = vand.u32 %v1568, 4294901760
        %1570 = vmatpush1.msra.mxu0 %v1569
        %v1571 = vand.u32 %v1311, 4294901760
        %v1572 = vsub.f32 %v1311, %v1571
        %v1573 = vand.u32 %v1572, 4294901760
        %v1574 = vsub.f32 %v1572, %v1573
        %v1575 = vand.u32 %v1574, 4294901760
        %1576 = vmatprep.subr.mxu0 %v1575
        %v1577 = vand.u32 %v1310, 4294901760
        %v1578 = vsub.f32 %v1310, %v1577
        %v1579 = vand.u32 %v1578, 4294901760
        %v1580 = vsub.f32 %v1578, %v1579
        %v1581 = vand.u32 %v1580, 4294901760
        %1582 = vmatpush1.msra.mxu0 %v1581
        %v1583 = vand.u32 %v1313, 4294901760
        %v1584 = vsub.f32 %v1313, %v1583
        %v1585 = vand.u32 %v1584, 4294901760
        %v1586 = vsub.f32 %v1584, %v1585
        %v1587 = vand.u32 %v1586, 4294901760
        %1588 = vmatprep.subr.mxu0 %v1587
        %v1589 = vand.u32 %v1312, 4294901760
        %v1590 = vsub.f32 %v1312, %v1589
        %v1591 = vand.u32 %v1590, 4294901760
        %v1592 = vsub.f32 %v1590, %v1591
        %v1593 = vand.u32 %v1592, 4294901760
        %1594 = vmatpush1.msra.mxu0 %v1593
        %v1595 = vand.u32 %v1315, 4294901760
        %v1596 = vsub.f32 %v1315, %v1595
        %v1597 = vand.u32 %v1596, 4294901760
        %v1598 = vsub.f32 %v1596, %v1597
        %v1599 = vand.u32 %v1598, 4294901760
        %1600 = vmatprep.subr.mxu0 %v1599
        %v1601 = vand.u32 %v1314, 4294901760
        %v1602 = vsub.f32 %v1314, %v1601
        %v1603 = vand.u32 %v1602, 4294901760
        %v1604 = vsub.f32 %v1602, %v1603
        %v1605 = vand.u32 %v1604, 4294901760
        %1606 = vmatpush1.msra.mxu0 %v1605
        %v1607 = vand.u32 %v1317, 4294901760
        %v1608 = vsub.f32 %v1317, %v1607
        %v1609 = vand.u32 %v1608, 4294901760
        %v1610 = vsub.f32 %v1608, %v1609
        %v1611 = vand.u32 %v1610, 4294901760
        %1612 = vmatprep.subr.mxu0 %v1611
        %v1613 = vand.u32 %v1316, 4294901760
        %v1614 = vsub.f32 %v1316, %v1613
        %v1615 = vand.u32 %v1614, 4294901760
        %v1616 = vsub.f32 %v1614, %v1615
        %v1617 = vand.u32 %v1616, 4294901760
        %1618 = vmatpush1.msra.mxu0 %v1617
        %v1619 = vand.u32 %v1319, 4294901760
        %v1620 = vsub.f32 %v1319, %v1619
        %v1621 = vand.u32 %v1620, 4294901760
        %v1622 = vsub.f32 %v1620, %v1621
        %v1623 = vand.u32 %v1622, 4294901760
        %1624 = vmatprep.subr.mxu0 %v1623
        %v1625 = vand.u32 %v1318, 4294901760
        %v1626 = vsub.f32 %v1318, %v1625
        %v1627 = vand.u32 %v1626, 4294901760
        %v1628 = vsub.f32 %v1626, %v1627
        %v1629 = vand.u32 %v1628, 4294901760
        %1630 = vmatpush1.msra.mxu0 %v1629
        %1631 = vmatprep.subr.mxu0 0.0
        %1632 = vmatpush1.msra.mxu0 0.0
        %1633 = vmatprep.subr.mxu0 0.0
        %1634 = vmatpush1.msra.mxu0 0.0
        %1635 = vmatprep.subr.mxu0 0.0
        %1636 = vmatpush1.msra.mxu0 0.0
        %1637 = vmatprep.subr.mxu0 0.0
        %1638 = vmatpush1.msra.mxu0 0.0
        %1639 = vmatprep.subr.mxu0 0.0
        %1640 = vmatpush1.msra.mxu0 0.0
        %1641 = vmatprep.subr.mxu0 0.0
        %1642 = vmatpush1.msra.mxu0 0.0
        %1643 = vmatprep.subr.mxu0 0.0
        %1644 = vmatpush1.msra.mxu0 0.0
        %1645 = vmatprep.subr.mxu0 0.0
        %1646 = vmatpush1.msra.mxu0 0.0
        %1647 = vmatprep.subr.mxu0 0.0
        %1648 = vmatpush1.msra.mxu0 0.0
        %1649 = vmatprep.subr.mxu0 0.0
        %1650 = vmatpush1.msra.mxu0 0.0
        %1651 = vmatprep.subr.mxu0 0.0
        %1652 = vmatpush1.msra.mxu0 0.0
        %1653 = vmatprep.subr.mxu0 0.0
        %1654 = vmatpush1.msra.mxu0 0.0
        %1655 = vmatprep.subr.mxu0 0.0
        %1656 = vmatpush1.msra.mxu0 0.0
        %1657 = vmatprep.subr.mxu0 0.0
        %1658 = vmatpush1.msra.mxu0 0.0
        %1659 = vmatprep.subr.mxu0 0.0
        %1660 = vmatpush1.msra.mxu0 0.0
        %1661 = vmatprep.subr.mxu0 0.0
        %1662 = vmatpush1.msra.mxu0 0.0
        %1663 = vmatprep.mubr.f32.mxu0 0.0
        %v1664 = vand.u32 %v1282, 4294901760
        %1665 = vmatmul.mubr.f32.gmra.mrb[0].mxu0 %v1664
        %v1666 = vpop.f32.mrb[0].mxu0
        %v1667 = vadd.f32 %v1424, %v1666
        %v1668 = vpop.f32.mrb[0].mxu0
        %v1669 = vadd.f32 %v1426, %v1668
        %1670 = vmatprep.mubr.f32.mxu0 0.0
        %v1671 = vand.u32 %v1283, 4294901760
        %1672 = vmatmul.mubr.f32.gmra.mrb[0].mxu0 %v1671
        %v1673 = vpop.f32.mrb[0].mxu0
        %v1674 = vadd.f32 %v1435, %v1673
        %v1675 = vpop.f32.mrb[0].mxu0
        %v1676 = vadd.f32 %v1437, %v1675
        %1677 = vdwg.mxu0
        %v1678 = vand.u32 %v1289, 4294901760
        %v1679 = vsub.f32 %v1289, %v1678
        %1680 = vmatprep.subr.mxu0 %v1679
        %v1681 = vand.u32 %v1288, 4294901760
        %v1682 = vsub.f32 %v1288, %v1681
        %1683 = vmatpush1.msra.mxu0 %v1682
        %v1684 = vand.u32 %v1291, 4294901760
        %v1685 = vsub.f32 %v1291, %v1684
        %1686 = vmatprep.subr.mxu0 %v1685
        %v1687 = vand.u32 %v1290, 4294901760
        %v1688 = vsub.f32 %v1290, %v1687
        %1689 = vmatpush1.msra.mxu0 %v1688
        %v1690 = vand.u32 %v1293, 4294901760
        %v1691 = vsub.f32 %v1293, %v1690
        %1692 = vmatprep.subr.mxu0 %v1691
        %v1693 = vand.u32 %v1292, 4294901760
        %v1694 = vsub.f32 %v1292, %v1693
        %1695 = vmatpush1.msra.mxu0 %v1694
        %v1696 = vand.u32 %v1295, 4294901760
        %v1697 = vsub.f32 %v1295, %v1696
        %1698 = vmatprep.subr.mxu0 %v1697
        %v1699 = vand.u32 %v1294, 4294901760
        %v1700 = vsub.f32 %v1294, %v1699
        %1701 = vmatpush1.msra.mxu0 %v1700
        %v1702 = vand.u32 %v1297, 4294901760
        %v1703 = vsub.f32 %v1297, %v1702
        %1704 = vmatprep.subr.mxu0 %v1703
        %v1705 = vand.u32 %v1296, 4294901760
        %v1706 = vsub.f32 %v1296, %v1705
        %1707 = vmatpush1.msra.mxu0 %v1706
        %v1708 = vand.u32 %v1299, 4294901760
        %v1709 = vsub.f32 %v1299, %v1708
        %1710 = vmatprep.subr.mxu0 %v1709
        %v1711 = vand.u32 %v1298, 4294901760
        %v1712 = vsub.f32 %v1298, %v1711
        %1713 = vmatpush1.msra.mxu0 %v1712
        %v1714 = vand.u32 %v1301, 4294901760
        %v1715 = vsub.f32 %v1301, %v1714
        %1716 = vmatprep.subr.mxu0 %v1715
        %v1717 = vand.u32 %v1300, 4294901760
        %v1718 = vsub.f32 %v1300, %v1717
        %1719 = vmatpush1.msra.mxu0 %v1718
        %v1720 = vand.u32 %v1303, 4294901760
        %v1721 = vsub.f32 %v1303, %v1720
        %1722 = vmatprep.subr.mxu0 %v1721
        %v1723 = vand.u32 %v1302, 4294901760
        %v1724 = vsub.f32 %v1302, %v1723
        %1725 = vmatpush1.msra.mxu0 %v1724
        %v1726 = vand.u32 %v1305, 4294901760
        %v1727 = vsub.f32 %v1305, %v1726
        %1728 = vmatprep.subr.mxu0 %v1727
        %v1729 = vand.u32 %v1304, 4294901760
        %v1730 = vsub.f32 %v1304, %v1729
        %1731 = vmatpush1.msra.mxu0 %v1730
        %v1732 = vand.u32 %v1307, 4294901760
        %v1733 = vsub.f32 %v1307, %v1732
        %1734 = vmatprep.subr.mxu0 %v1733
        %v1735 = vand.u32 %v1306, 4294901760
        %v1736 = vsub.f32 %v1306, %v1735
        %1737 = vmatpush1.msra.mxu0 %v1736
        %v1738 = vand.u32 %v1309, 4294901760
        %v1739 = vsub.f32 %v1309, %v1738
        %1740 = vmatprep.subr.mxu0 %v1739
        %v1741 = vand.u32 %v1308, 4294901760
        %v1742 = vsub.f32 %v1308, %v1741
        %1743 = vmatpush1.msra.mxu0 %v1742
        %v1744 = vand.u32 %v1311, 4294901760
        %v1745 = vsub.f32 %v1311, %v1744
        %1746 = vmatprep.subr.mxu0 %v1745
        %v1747 = vand.u32 %v1310, 4294901760
        %v1748 = vsub.f32 %v1310, %v1747
        %1749 = vmatpush1.msra.mxu0 %v1748
        %v1750 = vand.u32 %v1313, 4294901760
        %v1751 = vsub.f32 %v1313, %v1750
        %1752 = vmatprep.subr.mxu0 %v1751
        %v1753 = vand.u32 %v1312, 4294901760
        %v1754 = vsub.f32 %v1312, %v1753
        %1755 = vmatpush1.msra.mxu0 %v1754
        %v1756 = vand.u32 %v1315, 4294901760
        %v1757 = vsub.f32 %v1315, %v1756
        %1758 = vmatprep.subr.mxu0 %v1757
        %v1759 = vand.u32 %v1314, 4294901760
        %v1760 = vsub.f32 %v1314, %v1759
        %1761 = vmatpush1.msra.mxu0 %v1760
        %v1762 = vand.u32 %v1317, 4294901760
        %v1763 = vsub.f32 %v1317, %v1762
        %1764 = vmatprep.subr.mxu0 %v1763
        %v1765 = vand.u32 %v1316, 4294901760
        %v1766 = vsub.f32 %v1316, %v1765
        %1767 = vmatpush1.msra.mxu0 %v1766
        %v1768 = vand.u32 %v1319, 4294901760
        %v1769 = vsub.f32 %v1319, %v1768
        %1770 = vmatprep.subr.mxu0 %v1769
        %v1771 = vand.u32 %v1318, 4294901760
        %v1772 = vsub.f32 %v1318, %v1771
        %1773 = vmatpush1.msra.mxu0 %v1772
        %1774 = vmatprep.subr.mxu0 0.0
        %1775 = vmatpush1.msra.mxu0 0.0
        %1776 = vmatprep.subr.mxu0 0.0
        %1777 = vmatpush1.msra.mxu0 0.0
        %1778 = vmatprep.subr.mxu0 0.0
        %1779 = vmatpush1.msra.mxu0 0.0
        %1780 = vmatprep.subr.mxu0 0.0
        %1781 = vmatpush1.msra.mxu0 0.0
        %1782 = vmatprep.subr.mxu0 0.0
        %1783 = vmatpush1.msra.mxu0 0.0
        %1784 = vmatprep.subr.mxu0 0.0
        %1785 = vmatpush1.msra.mxu0 0.0
        %1786 = vmatprep.subr.mxu0 0.0
        %1787 = vmatpush1.msra.mxu0 0.0
        %1788 = vmatprep.subr.mxu0 0.0
        %1789 = vmatpush1.msra.mxu0 0.0
        %1790 = vmatprep.subr.mxu0 0.0
        %1791 = vmatpush1.msra.mxu0 0.0
        %1792 = vmatprep.subr.mxu0 0.0
        %1793 = vmatpush1.msra.mxu0 0.0
        %1794 = vmatprep.subr.mxu0 0.0
        %1795 = vmatpush1.msra.mxu0 0.0
        %1796 = vmatprep.subr.mxu0 0.0
        %1797 = vmatpush1.msra.mxu0 0.0
        %1798 = vmatprep.subr.mxu0 0.0
        %1799 = vmatpush1.msra.mxu0 0.0
        %1800 = vmatprep.subr.mxu0 0.0
        %1801 = vmatpush1.msra.mxu0 0.0
        %1802 = vmatprep.subr.mxu0 0.0
        %1803 = vmatpush1.msra.mxu0 0.0
        %1804 = vmatprep.subr.mxu0 0.0
        %1805 = vmatpush1.msra.mxu0 0.0
        %1806 = vmatprep.mubr.f32.mxu0 0.0
        %v1807 = vand.u32 %v1282, 4294901760
        %v1808 = vsub.f32 %v1282, %v1807
        %1809 = vmatmul.mubr.f32.gmra.mrb[0].mxu0 %v1808
        %v1810 = vpop.f32.mrb[0].mxu0
        %v1811 = vadd.f32 %v1667, %v1810
        %v1812 = vpop.f32.mrb[0].mxu0
        %v1813 = vadd.f32 %v1669, %v1812
        %1814 = vmatprep.mubr.f32.mxu0 0.0
        %v1815 = vand.u32 %v1283, 4294901760
        %v1816 = vsub.f32 %v1283, %v1815
        %1817 = vmatmul.mubr.f32.gmra.mrb[0].mxu0 %v1816
        %v1818 = vpop.f32.mrb[0].mxu0
        %v1819 = vadd.f32 %v1674, %v1818
        %v1820 = vpop.f32.mrb[0].mxu0
        %v1821 = vadd.f32 %v1676, %v1820
        %1822 = vdwg.mxu0
        %v1823 = vand.u32 %v1289, 4294901760
        %1824 = vmatprep.subr.mxu0 %v1823
        %v1825 = vand.u32 %v1288, 4294901760
        %1826 = vmatpush1.msra.mxu0 %v1825
        %v1827 = vand.u32 %v1291, 4294901760
        %1828 = vmatprep.subr.mxu0 %v1827
        %v1829 = vand.u32 %v1290, 4294901760
        %1830 = vmatpush1.msra.mxu0 %v1829
        %v1831 = vand.u32 %v1293, 4294901760
        %1832 = vmatprep.subr.mxu0 %v1831
        %v1833 = vand.u32 %v1292, 4294901760
        %1834 = vmatpush1.msra.mxu0 %v1833
        %v1835 = vand.u32 %v1295, 4294901760
        %1836 = vmatprep.subr.mxu0 %v1835
        %v1837 = vand.u32 %v1294, 4294901760
        %1838 = vmatpush1.msra.mxu0 %v1837
        %v1839 = vand.u32 %v1297, 4294901760
        %1840 = vmatprep.subr.mxu0 %v1839
        %v1841 = vand.u32 %v1296, 4294901760
        %1842 = vmatpush1.msra.mxu0 %v1841
        %v1843 = vand.u32 %v1299, 4294901760
        %1844 = vmatprep.subr.mxu0 %v1843
        %v1845 = vand.u32 %v1298, 4294901760
        %1846 = vmatpush1.msra.mxu0 %v1845
        %v1847 = vand.u32 %v1301, 4294901760
        %1848 = vmatprep.subr.mxu0 %v1847
        %v1849 = vand.u32 %v1300, 4294901760
        %1850 = vmatpush1.msra.mxu0 %v1849
        %v1851 = vand.u32 %v1303, 4294901760
        %1852 = vmatprep.subr.mxu0 %v1851
        %v1853 = vand.u32 %v1302, 4294901760
        %1854 = vmatpush1.msra.mxu0 %v1853
        %v1855 = vand.u32 %v1305, 4294901760
        %1856 = vmatprep.subr.mxu0 %v1855
        %v1857 = vand.u32 %v1304, 4294901760
        %1858 = vmatpush1.msra.mxu0 %v1857
        %v1859 = vand.u32 %v1307, 4294901760
        %1860 = vmatprep.subr.mxu0 %v1859
        %v1861 = vand.u32 %v1306, 4294901760
        %1862 = vmatpush1.msra.mxu0 %v1861
        %v1863 = vand.u32 %v1309, 4294901760
        %1864 = vmatprep.subr.mxu0 %v1863
        %v1865 = vand.u32 %v1308, 4294901760
        %1866 = vmatpush1.msra.mxu0 %v1865
        %v1867 = vand.u32 %v1311, 4294901760
        %1868 = vmatprep.subr.mxu0 %v1867
        %v1869 = vand.u32 %v1310, 4294901760
        %1870 = vmatpush1.msra.mxu0 %v1869
        %v1871 = vand.u32 %v1313, 4294901760
        %1872 = vmatprep.subr.mxu0 %v1871
        %v1873 = vand.u32 %v1312, 4294901760
        %1874 = vmatpush1.msra.mxu0 %v1873
        %v1875 = vand.u32 %v1315, 4294901760
        %1876 = vmatprep.subr.mxu0 %v1875
        %v1877 = vand.u32 %v1314, 4294901760
        %1878 = vmatpush1.msra.mxu0 %v1877
        %v1879 = vand.u32 %v1317, 4294901760
        %1880 = vmatprep.subr.mxu0 %v1879
        %v1881 = vand.u32 %v1316, 4294901760
        %1882 = vmatpush1.msra.mxu0 %v1881
        %v1883 = vand.u32 %v1319, 4294901760
        %1884 = vmatprep.subr.mxu0 %v1883
        %v1885 = vand.u32 %v1318, 4294901760
        %1886 = vmatpush1.msra.mxu0 %v1885
        %1887 = vmatprep.subr.mxu0 0.0
        %1888 = vmatpush1.msra.mxu0 0.0
        %1889 = vmatprep.subr.mxu0 0.0
        %1890 = vmatpush1.msra.mxu0 0.0
        %1891 = vmatprep.subr.mxu0 0.0
        %1892 = vmatpush1.msra.mxu0 0.0
        %1893 = vmatprep.subr.mxu0 0.0
        %1894 = vmatpush1.msra.mxu0 0.0
        %1895 = vmatprep.subr.mxu0 0.0
        %1896 = vmatpush1.msra.mxu0 0.0
        %1897 = vmatprep.subr.mxu0 0.0
        %1898 = vmatpush1.msra.mxu0 0.0
        %1899 = vmatprep.subr.mxu0 0.0
        %1900 = vmatpush1.msra.mxu0 0.0
        %1901 = vmatprep.subr.mxu0 0.0
        %1902 = vmatpush1.msra.mxu0 0.0
        %1903 = vmatprep.subr.mxu0 0.0
        %1904 = vmatpush1.msra.mxu0 0.0
        %1905 = vmatprep.subr.mxu0 0.0
        %1906 = vmatpush1.msra.mxu0 0.0
        %1907 = vmatprep.subr.mxu0 0.0
        %1908 = vmatpush1.msra.mxu0 0.0
        %1909 = vmatprep.subr.mxu0 0.0
        %1910 = vmatpush1.msra.mxu0 0.0
        %1911 = vmatprep.subr.mxu0 0.0
        %1912 = vmatpush1.msra.mxu0 0.0
        %1913 = vmatprep.subr.mxu0 0.0
        %1914 = vmatpush1.msra.mxu0 0.0
        %1915 = vmatprep.subr.mxu0 0.0
        %1916 = vmatpush1.msra.mxu0 0.0
        %1917 = vmatprep.subr.mxu0 0.0
        %1918 = vmatpush1.msra.mxu0 0.0
        %1919 = vmatprep.mubr.f32.mxu0 0.0
        %v1920 = vand.u32 %v1282, 4294901760
        %v1921 = vsub.f32 %v1282, %v1920
        %v1922 = vand.u32 %v1921, 4294901760
        %1923 = vmatmul.mubr.f32.gmra.mrb[0].mxu0 %v1922
        %v1924 = vpop.f32.mrb[0].mxu0
        %v1925 = vadd.f32 %v1811, %v1924
        %v1926 = vpop.f32.mrb[0].mxu0
        %v1927 = vadd.f32 %v1813, %v1926
        %1928 = vmatprep.mubr.f32.mxu0 0.0
        %v1929 = vand.u32 %v1283, 4294901760
        %v1930 = vsub.f32 %v1283, %v1929
        %v1931 = vand.u32 %v1930, 4294901760
        %1932 = vmatmul.mubr.f32.gmra.mrb[0].mxu0 %v1931
        %v1933 = vpop.f32.mrb[0].mxu0
        %v1934 = vadd.f32 %v1819, %v1933
        %v1935 = vpop.f32.mrb[0].mxu0
        %v1936 = vadd.f32 %v1821, %v1935
        %1937 = vdwg.mxu0
        %v1938 = vand.u32 %v1289, 4294901760
        %v1939 = vsub.f32 %v1289, %v1938
        %v1940 = vand.u32 %v1939, 4294901760
        %1941 = vmatprep.subr.mxu0 %v1940
        %v1942 = vand.u32 %v1288, 4294901760
        %v1943 = vsub.f32 %v1288, %v1942
        %v1944 = vand.u32 %v1943, 4294901760
        %1945 = vmatpush1.msra.mxu0 %v1944
        %v1946 = vand.u32 %v1291, 4294901760
        %v1947 = vsub.f32 %v1291, %v1946
        %v1948 = vand.u32 %v1947, 4294901760
        %1949 = vmatprep.subr.mxu0 %v1948
        %v1950 = vand.u32 %v1290, 4294901760
        %v1951 = vsub.f32 %v1290, %v1950
        %v1952 = vand.u32 %v1951, 4294901760
        %1953 = vmatpush1.msra.mxu0 %v1952
        %v1954 = vand.u32 %v1293, 4294901760
        %v1955 = vsub.f32 %v1293, %v1954
        %v1956 = vand.u32 %v1955, 4294901760
        %1957 = vmatprep.subr.mxu0 %v1956
        %v1958 = vand.u32 %v1292, 4294901760
        %v1959 = vsub.f32 %v1292, %v1958
        %v1960 = vand.u32 %v1959, 4294901760
        %1961 = vmatpush1.msra.mxu0 %v1960
        %v1962 = vand.u32 %v1295, 4294901760
        %v1963 = vsub.f32 %v1295, %v1962
        %v1964 = vand.u32 %v1963, 4294901760
        %1965 = vmatprep.subr.mxu0 %v1964
        %v1966 = vand.u32 %v1294, 4294901760
        %v1967 = vsub.f32 %v1294, %v1966
        %v1968 = vand.u32 %v1967, 4294901760
        %1969 = vmatpush1.msra.mxu0 %v1968
        %v1970 = vand.u32 %v1297, 4294901760
        %v1971 = vsub.f32 %v1297, %v1970
        %v1972 = vand.u32 %v1971, 4294901760
        %1973 = vmatprep.subr.mxu0 %v1972
        %v1974 = vand.u32 %v1296, 4294901760
        %v1975 = vsub.f32 %v1296, %v1974
        %v1976 = vand.u32 %v1975, 4294901760
        %1977 = vmatpush1.msra.mxu0 %v1976
        %v1978 = vand.u32 %v1299, 4294901760
        %v1979 = vsub.f32 %v1299, %v1978
        %v1980 = vand.u32 %v1979, 4294901760
        %1981 = vmatprep.subr.mxu0 %v1980
        %v1982 = vand.u32 %v1298, 4294901760
        %v1983 = vsub.f32 %v1298, %v1982
        %v1984 = vand.u32 %v1983, 4294901760
        %1985 = vmatpush1.msra.mxu0 %v1984
        %v1986 = vand.u32 %v1301, 4294901760
        %v1987 = vsub.f32 %v1301, %v1986
        %v1988 = vand.u32 %v1987, 4294901760
        %1989 = vmatprep.subr.mxu0 %v1988
        %v1990 = vand.u32 %v1300, 4294901760
        %v1991 = vsub.f32 %v1300, %v1990
        %v1992 = vand.u32 %v1991, 4294901760
        %1993 = vmatpush1.msra.mxu0 %v1992
        %v1994 = vand.u32 %v1303, 4294901760
        %v1995 = vsub.f32 %v1303, %v1994
        %v1996 = vand.u32 %v1995, 4294901760
        %1997 = vmatprep.subr.mxu0 %v1996
        %v1998 = vand.u32 %v1302, 4294901760
        %v1999 = vsub.f32 %v1302, %v1998
        %v2000 = vand.u32 %v1999, 4294901760
        %2001 = vmatpush1.msra.mxu0 %v2000
        %v2002 = vand.u32 %v1305, 4294901760
        %v2003 = vsub.f32 %v1305, %v2002
        %v2004 = vand.u32 %v2003, 4294901760
        %2005 = vmatprep.subr.mxu0 %v2004
        %v2006 = vand.u32 %v1304, 4294901760
        %v2007 = vsub.f32 %v1304, %v2006
        %v2008 = vand.u32 %v2007, 4294901760
        %2009 = vmatpush1.msra.mxu0 %v2008
        %v2010 = vand.u32 %v1307, 4294901760
        %v2011 = vsub.f32 %v1307, %v2010
        %v2012 = vand.u32 %v2011, 4294901760
        %2013 = vmatprep.subr.mxu0 %v2012
        %v2014 = vand.u32 %v1306, 4294901760
        %v2015 = vsub.f32 %v1306, %v2014
        %v2016 = vand.u32 %v2015, 4294901760
        %2017 = vmatpush1.msra.mxu0 %v2016
        %v2018 = vand.u32 %v1309, 4294901760
        %v2019 = vsub.f32 %v1309, %v2018
        %v2020 = vand.u32 %v2019, 4294901760
        %2021 = vmatprep.subr.mxu0 %v2020
        %v2022 = vand.u32 %v1308, 4294901760
        %v2023 = vsub.f32 %v1308, %v2022
        %v2024 = vand.u32 %v2023, 4294901760
        %2025 = vmatpush1.msra.mxu0 %v2024
        %v2026 = vand.u32 %v1311, 4294901760
        %v2027 = vsub.f32 %v1311, %v2026
        %v2028 = vand.u32 %v2027, 4294901760
        %2029 = vmatprep.subr.mxu0 %v2028
        %v2030 = vand.u32 %v1310, 4294901760
        %v2031 = vsub.f32 %v1310, %v2030
        %v2032 = vand.u32 %v2031, 4294901760
        %2033 = vmatpush1.msra.mxu0 %v2032
        %v2034 = vand.u32 %v1313, 4294901760
        %v2035 = vsub.f32 %v1313, %v2034
        %v2036 = vand.u32 %v2035, 4294901760
        %2037 = vmatprep.subr.mxu0 %v2036
        %v2038 = vand.u32 %v1312, 4294901760
        %v2039 = vsub.f32 %v1312, %v2038
        %v2040 = vand.u32 %v2039, 4294901760
        %2041 = vmatpush1.msra.mxu0 %v2040
        %v2042 = vand.u32 %v1315, 4294901760
        %v2043 = vsub.f32 %v1315, %v2042
        %v2044 = vand.u32 %v2043, 4294901760
        %2045 = vmatprep.subr.mxu0 %v2044
        %v2046 = vand.u32 %v1314, 4294901760
        %v2047 = vsub.f32 %v1314, %v2046
        %v2048 = vand.u32 %v2047, 4294901760
        %2049 = vmatpush1.msra.mxu0 %v2048
        %v2050 = vand.u32 %v1317, 4294901760
        %v2051 = vsub.f32 %v1317, %v2050
        %v2052 = vand.u32 %v2051, 4294901760
        %2053 = vmatprep.subr.mxu0 %v2052
        %v2054 = vand.u32 %v1316, 4294901760
        %v2055 = vsub.f32 %v1316, %v2054
        %v2056 = vand.u32 %v2055, 4294901760
        %2057 = vmatpush1.msra.mxu0 %v2056
        %v2058 = vand.u32 %v1319, 4294901760
        %v2059 = vsub.f32 %v1319, %v2058
        %v2060 = vand.u32 %v2059, 4294901760
        %2061 = vmatprep.subr.mxu0 %v2060
        %v2062 = vand.u32 %v1318, 4294901760
        %v2063 = vsub.f32 %v1318, %v2062
        %v2064 = vand.u32 %v2063, 4294901760
        %2065 = vmatpush1.msra.mxu0 %v2064
        %2066 = vmatprep.subr.mxu0 0.0
        %2067 = vmatpush1.msra.mxu0 0.0
        %2068 = vmatprep.subr.mxu0 0.0
        %2069 = vmatpush1.msra.mxu0 0.0
        %2070 = vmatprep.subr.mxu0 0.0
        %2071 = vmatpush1.msra.mxu0 0.0
        %2072 = vmatprep.subr.mxu0 0.0
        %2073 = vmatpush1.msra.mxu0 0.0
        %2074 = vmatprep.subr.mxu0 0.0
        %2075 = vmatpush1.msra.mxu0 0.0
        %2076 = vmatprep.subr.mxu0 0.0
        %2077 = vmatpush1.msra.mxu0 0.0
        %2078 = vmatprep.subr.mxu0 0.0
        %2079 = vmatpush1.msra.mxu0 0.0
        %2080 = vmatprep.subr.mxu0 0.0
        %2081 = vmatpush1.msra.mxu0 0.0
        %2082 = vmatprep.subr.mxu0 0.0
        %2083 = vmatpush1.msra.mxu0 0.0
        %2084 = vmatprep.subr.mxu0 0.0
        %2085 = vmatpush1.msra.mxu0 0.0
        %2086 = vmatprep.subr.mxu0 0.0
        %2087 = vmatpush1.msra.mxu0 0.0
        %2088 = vmatprep.subr.mxu0 0.0
        %2089 = vmatpush1.msra.mxu0 0.0
        %2090 = vmatprep.subr.mxu0 0.0
        %2091 = vmatpush1.msra.mxu0 0.0
        %2092 = vmatprep.subr.mxu0 0.0
        %2093 = vmatpush1.msra.mxu0 0.0
        %2094 = vmatprep.subr.mxu0 0.0
        %2095 = vmatpush1.msra.mxu0 0.0
        %2096 = vmatprep.subr.mxu0 0.0
        %2097 = vmatpush1.msra.mxu0 0.0
        %2098 = vmatprep.mubr.f32.mxu0 0.0
        %v2099 = vand.u32 %v1282, 4294901760
        %2100 = vmatmul.mubr.f32.gmra.mrb[0].mxu0 %v2099
        %v2101 = vpop.f32.mrb[0].mxu0
        %v2102 = vadd.f32 %v1925, %v2101
        %v2103 = vpop.f32.mrb[0].mxu0
        %v2104 = vadd.f32 %v1927, %v2103
        %2105 = vmatprep.mubr.f32.mxu0 0.0
        %v2106 = vand.u32 %v1283, 4294901760
        %2107 = vmatmul.mubr.f32.gmra.mrb[0].mxu0 %v2106
        %v2108 = vpop.f32.mrb[0].mxu0
        %v2109 = vadd.f32 %v1934, %v2108
        %v2110 = vpop.f32.mrb[0].mxu0
        %v2111 = vadd.f32 %v1936, %v2110
        %2112 = vdwg.mxu0
        %v2113 = vand.u32 %v1289, 4294901760
        %2114 = vmatprep.subr.mxu0 %v2113
        %v2115 = vand.u32 %v1288, 4294901760
        %2116 = vmatpush1.msra.mxu0 %v2115
        %v2117 = vand.u32 %v1291, 4294901760
        %2118 = vmatprep.subr.mxu0 %v2117
        %v2119 = vand.u32 %v1290, 4294901760
        %2120 = vmatpush1.msra.mxu0 %v2119
        %v2121 = vand.u32 %v1293, 4294901760
        %2122 = vmatprep.subr.mxu0 %v2121
        %v2123 = vand.u32 %v1292, 4294901760
        %2124 = vmatpush1.msra.mxu0 %v2123
        %v2125 = vand.u32 %v1295, 4294901760
        %2126 = vmatprep.subr.mxu0 %v2125
        %v2127 = vand.u32 %v1294, 4294901760
        %2128 = vmatpush1.msra.mxu0 %v2127
        %v2129 = vand.u32 %v1297, 4294901760
        %2130 = vmatprep.subr.mxu0 %v2129
        %v2131 = vand.u32 %v1296, 4294901760
        %2132 = vmatpush1.msra.mxu0 %v2131
        %v2133 = vand.u32 %v1299, 4294901760
        %2134 = vmatprep.subr.mxu0 %v2133
        %v2135 = vand.u32 %v1298, 4294901760
        %2136 = vmatpush1.msra.mxu0 %v2135
        %v2137 = vand.u32 %v1301, 4294901760
        %2138 = vmatprep.subr.mxu0 %v2137
        %v2139 = vand.u32 %v1300, 4294901760
        %2140 = vmatpush1.msra.mxu0 %v2139
        %v2141 = vand.u32 %v1303, 4294901760
        %2142 = vmatprep.subr.mxu0 %v2141
        %v2143 = vand.u32 %v1302, 4294901760
        %2144 = vmatpush1.msra.mxu0 %v2143
        %v2145 = vand.u32 %v1305, 4294901760
        %2146 = vmatprep.subr.mxu0 %v2145
        %v2147 = vand.u32 %v1304, 4294901760
        %2148 = vmatpush1.msra.mxu0 %v2147
        %v2149 = vand.u32 %v1307, 4294901760
        %2150 = vmatprep.subr.mxu0 %v2149
        %v2151 = vand.u32 %v1306, 4294901760
        %2152 = vmatpush1.msra.mxu0 %v2151
        %v2153 = vand.u32 %v1309, 4294901760
        %2154 = vmatprep.subr.mxu0 %v2153
        %v2155 = vand.u32 %v1308, 4294901760
        %2156 = vmatpush1.msra.mxu0 %v2155
        %v2157 = vand.u32 %v1311, 4294901760
        %2158 = vmatprep.subr.mxu0 %v2157
        %v2159 = vand.u32 %v1310, 4294901760
        %2160 = vmatpush1.msra.mxu0 %v2159
        %v2161 = vand.u32 %v1313, 4294901760
        %2162 = vmatprep.subr.mxu0 %v2161
        %v2163 = vand.u32 %v1312, 4294901760
        %2164 = vmatpush1.msra.mxu0 %v2163
        %v2165 = vand.u32 %v1315, 4294901760
        %2166 = vmatprep.subr.mxu0 %v2165
        %v2167 = vand.u32 %v1314, 4294901760
        %2168 = vmatpush1.msra.mxu0 %v2167
        %v2169 = vand.u32 %v1317, 4294901760
        %2170 = vmatprep.subr.mxu0 %v2169
        %v2171 = vand.u32 %v1316, 4294901760
        %2172 = vmatpush1.msra.mxu0 %v2171
        %v2173 = vand.u32 %v1319, 4294901760
        %2174 = vmatprep.subr.mxu0 %v2173
        %v2175 = vand.u32 %v1318, 4294901760
        %2176 = vmatpush1.msra.mxu0 %v2175
        %2177 = vmatprep.subr.mxu0 0.0
        %2178 = vmatpush1.msra.mxu0 0.0
        %2179 = vmatprep.subr.mxu0 0.0
        %2180 = vmatpush1.msra.mxu0 0.0
        %2181 = vmatprep.subr.mxu0 0.0
        %2182 = vmatpush1.msra.mxu0 0.0
        %2183 = vmatprep.subr.mxu0 0.0
        %2184 = vmatpush1.msra.mxu0 0.0
        %2185 = vmatprep.subr.mxu0 0.0
        %2186 = vmatpush1.msra.mxu0 0.0
        %2187 = vmatprep.subr.mxu0 0.0
        %2188 = vmatpush1.msra.mxu0 0.0
        %2189 = vmatprep.subr.mxu0 0.0
        %2190 = vmatpush1.msra.mxu0 0.0
        %2191 = vmatprep.subr.mxu0 0.0
        %2192 = vmatpush1.msra.mxu0 0.0
        %2193 = vmatprep.subr.mxu0 0.0
        %2194 = vmatpush1.msra.mxu0 0.0
        %2195 = vmatprep.subr.mxu0 0.0
        %2196 = vmatpush1.msra.mxu0 0.0
        %2197 = vmatprep.subr.mxu0 0.0
        %2198 = vmatpush1.msra.mxu0 0.0
        %2199 = vmatprep.subr.mxu0 0.0
        %2200 = vmatpush1.msra.mxu0 0.0
        %2201 = vmatprep.subr.mxu0 0.0
        %2202 = vmatpush1.msra.mxu0 0.0
        %2203 = vmatprep.subr.mxu0 0.0
        %2204 = vmatpush1.msra.mxu0 0.0
        %2205 = vmatprep.subr.mxu0 0.0
        %2206 = vmatpush1.msra.mxu0 0.0
        %2207 = vmatprep.subr.mxu0 0.0
        %2208 = vmatpush1.msra.mxu0 0.0
        %2209 = vmatprep.mubr.f32.mxu0 0.0
        %v2210 = vand.u32 %v1282, 4294901760
        %2211 = vmatmul.mubr.f32.gmra.mrb[0].mxu0 %v2210
        %v2212 = vpop.f32.mrb[0].mxu0
        %v2213 = vadd.f32 %v2102, %v2212
        %v2214 = vpop.f32.mrb[0].mxu0
        %v2215 = vadd.f32 %v2104, %v2214
        %2216 = vmatprep.mubr.f32.mxu0 0.0
        %v2217 = vand.u32 %v1283, 4294901760
        %2218 = vmatmul.mubr.f32.gmra.mrb[0].mxu0 %v2217
        %v2219 = vpop.f32.mrb[0].mxu0
        %v2220 = vadd.f32 %v2109, %v2219
        %v2221 = vpop.f32.mrb[0].mxu0
        %v2222 = vadd.f32 %v2111, %v2221
        %2223 = vdwg.mxu0
        %v2224 = vadd.f32 %v1284, %v2213
        %v2225 = vadd.f32 %v1285, %v2215
        %v2226 = vadd.f32 %v1286, %v2220
        %v2227 = vadd.f32 %v1287, %v2222
        %2228 = vst [vmem:[#allocation2] sm:$0xff] %v2224
        %2229 = vst [vmem:[#allocation2 + $0x8] sm:$0xff] %v2225
        %2230 = vst [vmem:[#allocation2 + $0x10] sm:$0xff] %v2226
        %2231 = vst [vmem:[#allocation2 + $0x18] sm:$0xff] %v2227
        %p2232 = scmp.eq.s32.totalorder %s23, 1
        // Predicated region
        $region57: #{tpu_custom_call.1} parent=39 // pred_check
          %p2233 = pneg %p2232
        $region58: #{tpu_custom_call.1} parent=39 // pred_check_branch
          %2235 = sbr.rel (%p2233) target = $region60
        $region59: #{tpu_custom_call.1} parent=39 // pred_region
          %v2236 = vld [vmem:[#allocation2] sm:$0xff]
          %v2237 = vld [vmem:[#allocation2 + $0x8] sm:$0xff]
          %v2238 = vld [vmem:[#allocation2 + $0x10] sm:$0xff]
          %v2239 = vld [vmem:[#allocation2 + $0x18] sm:$0xff]
          %v2240 = vld [vmem:[%s5] sm:$0x3]
          %v2242 = vlaneseq
          %v2243 = vshrl.u32 %v2242, 7
          %v2244 = vsub.s32 0, %v2243
          %v2245 = vrot.slane %v2240, %v2244
          %v2246 = vlaneseq
          %v2247 = vshrl.u32 %v2246, 7
          %v2248 = vsub.s32 1, %v2247
          %v2249 = vrot.slane %v2240, %v2248
          %v2252 = vadd.f32 %v2236, %v2245
          %v2253 = vadd.f32 %v2237, %v2249
          %v2254 = vadd.f32 %v2238, %v2245
          %v2255 = vadd.f32 %v2239, %v2249
          %2256 = vst [vmem:[#allocation11] sm:$0xff] %v2252
          %2257 = vst [vmem:[#allocation11 + $0x8] sm:$0xff] %v2253
          %2258 = vst [vmem:[#allocation11 + $0x10] sm:$0xff] %v2254
          %2259 = vst [vmem:[#allocation11 + $0x18] sm:$0xff] %v2255
        $region60: #{tpu_custom_call.1} parent=39 // pred_fallthru
          _
        // Predicated region
        $region61: #{tpu_custom_call.1} parent=39 // pred_check
          %p2260 = pneg %p163
        $region62: #{tpu_custom_call.1} parent=39 // pred_check_branch
          %2262 = sbr.rel (%p2260) target = $region64
        $region63: #{tpu_custom_call.1} parent=39 // pred_region
          %s2264 = ssub.s32 512, 512
          %2265 = vsyncadd [#allocation7], %s2264
          %s2266 = sshll.u32 [#allocation11], 4
          %s2267 = int_to_ptr.vmem [resolvable:$true] %s2266
          %2272 = dma.vmem_to_hbm [thread:$0]  %s2267, 512, %s6, [#allocation7], 256, 256, 16
        $region64: #{tpu_custom_call.1} parent=39 // pred_fallthru
          _
        // Predicated region
        $region65: #{tpu_custom_call.1} parent=39 // pred_check
          %p2273 = pneg %p163
        $region66: #{tpu_custom_call.1} parent=39 // pred_check_branch
          %2275 = sbr.rel (%p2273) target = $region68
        $region67: #{tpu_custom_call.1} parent=39 // pred_region
          %2276 = dma.done [#allocation7], 512
        $region68: #{tpu_custom_call.1} parent=39 // pred_fallthru
          _
      $region40: #{tpu_custom_call.1} parent=5 // pred_fallthru
        _
      %p2277 = scmp.le.s32.totalorder 2, %s18
      // Predicated region
      $region69: #{tpu_custom_call.1} parent=5 // pred_check
        %p2278 = pneg %p2277
      $region70: #{tpu_custom_call.1} parent=5 // pred_check_branch
        %2280 = sbr.rel (%p2278) target = $region72
      $region71: #{tpu_custom_call.1} parent=5 // pred_region
        %s2281 = ssub.s32 %s18, 2
      $region72: #{tpu_custom_call.1} parent=5 // pred_fallthru
        _
    $region6: #{tpu_custom_call.1} parent=1 // loop_footer
      %s22 = sadd.s32 1, %s18
    $region7: #{tpu_custom_call.1} parent=1 // loop_footer_branch
      %17 = sbr.rel target = $region3
    $region8: #{tpu_custom_call.1} parent=1 // loop_exit
      _
    %2282 = vsyncpa [#allocation6], 1
    %s2283 = scalar_lea.sflag [#allocation6], 1
    %2284 = vsyncpa %s2283, 1
    %2285 = vsyncpa [#allocation9], 1
    %s2286 = scalar_lea.sflag [#allocation9], 1
    %2287 = vsyncpa %s2286, 1
    %2288 = vsyncpa [#allocation7], 1
    %s2289 = scalar_lea.sflag [#allocation7], 1
    %2290 = vsyncpa %s2289, 1

</llo_original>
